<compile_context>
chip_gen: v6e
topology: v6e:2x2x1
jax: 0.10.0
libtpu: 0.0.40
codegen_flags: <defaults>
</compile_context>

<pallas_src>
import functools

import jax
import jax.numpy as jnp
from jax import lax
from jax.experimental import pallas as pl
from jax.experimental.pallas import tpu as pltpu

_EPS = 1e-5
_VMEM_LIMIT = 32 * 1024 * 1024  # safe scoped limit on v5e/v6e/v7x


def _round_up(x, m):
    return (x + m - 1) // m * m


# ---------------------------------------------------------------------------
# Pass 1: tiled conv-as-matmul + bias, with optional per-tile BN partial stats.
# ---------------------------------------------------------------------------
def _make_conv_kernel(tm, m_true, o_pad, with_stats):
    def kernel(p_ref, w_ref, b_ref, conv_ref, *rest):
        if with_stats:
            stats_ref, acc_ref = rest
        else:
            (acc_ref,) = rest

        # NOTE: all grid queries happen at the kernel top level (never inside
        # pl.when bodies) and are passed into the epilogue via closure.
        i = pl.program_id(0)
        k = pl.program_id(1)
        nk = pl.num_programs(1)

        @pl.when(k == 0)
        def _():
            acc_ref[...] = jnp.zeros_like(acc_ref)

        # bf16 x bf16 -> f32 accumulation on the MXU.
        acc_ref[...] += jnp.dot(p_ref[...], w_ref[...],
                                preferred_element_type=jnp.float32)

        @pl.when(k == nk - 1)
        def _():
            h = acc_ref[...] + b_ref[...]          # bias broadcast over rows (f32)
            conv_ref[...] = h.astype(conv_ref.dtype)

            if with_stats:
                # Per-tile partial sums for BatchNorm, masking padded M rows.
                rows = i * tm + lax.broadcasted_iota(jnp.int32, (tm, o_pad), 0)
                hm = jnp.where(rows < m_true, h, 0.0)
                s = jnp.sum(hm, axis=0, keepdims=True)           # (1, O_pad)
                ss = jnp.sum(hm * hm, axis=0, keepdims=True)     # (1, O_pad)
                ridx = lax.broadcasted_iota(jnp.int32, (8, o_pad), 0)
                stats_ref[...] = (jnp.where(ridx == 0, s, 0.0)
                                  + jnp.where(ridx == 1, ss, 0.0))

    return kernel


# ---------------------------------------------------------------------------
# Pass 2: apply the folded BatchNorm affine (h * scale + shift), tiled over M.
# ---------------------------------------------------------------------------
def _bn_apply_kernel(h_ref, scale_ref, shift_ref, o_ref):
    o_ref[...] = (h_ref[...] * scale_ref[...] + shift_ref[...]).astype(o_ref.dtype)


# ---------------------------------------------------------------------------
# Wrapper-side im2col (stride 1, PyTorch padding = k // 2).
# ---------------------------------------------------------------------------
def _im2col(x, kh, kw):
    """x: [N, C, H, W] -> patches [N*Ho*Wo, C*kh*kw]."""
    n, c, h, w = x.shape
    ph, pw = kh // 2, kw // 2
    ho = h + 2 * ph - kh + 1
    wo = w + 2 * pw - kw + 1
    xp = jnp.pad(x, ((0, 0), (0, 0), (ph, ph), (pw, pw)))
    cols = [xp[:, :, i:i + ho, j:j + wo] for i in range(kh) for j in range(kw)]
    patches = jnp.stack(cols, axis=2)                 # [N, C, kh*kw, Ho, Wo]
    patches = patches.reshape(n, c * kh * kw, ho, wo)
    patches = jnp.transpose(patches, (0, 2, 3, 1))    # [N, Ho, Wo, K]
    return patches.reshape(n * ho * wo, c * kh * kw), ho, wo


@functools.partial(jax.jit, static_argnames=("kernel_size", "bn"))
def basic_conv2d(x, weight, bias, gamma, beta, *, kernel_size, bn):
    """Equivalent of BasicConv2d.forward (training-mode BatchNorm).

    x: [N, C, H, W] f32 (NCHW), weight: [O, C, kh, kw], bias/gamma/beta: [O]
    returns [N, O, Ho, Wo] f32.
    """
    n, c, h, w = x.shape
    o = weight.shape[0]
    kh, kw = kernel_size
    k_dim = c * kh * kw

    patches, ho, wo = _im2col(x.astype(jnp.float32), kh, kw)     # [M, K]
    m = n * ho * wo

    # ---- tiling / padding (lane-dense: K, O -> multiples of 128) ----
    tm = min(256, _round_up(m, 8))
    m_pad = _round_up(m, tm)
    tk = min(512, _round_up(k_dim, 128))
    k_pad = _round_up(k_dim, tk)
    o_pad = _round_up(o, 128)
    num_m, num_k = m_pad // tm, k_pad // tk

    compute_dtype = jnp.bfloat16
    p_pad = jnp.pad(patches, ((0, m_pad - m), (0, k_pad - k_dim))).astype(compute_dtype)
    w2d = jnp.transpose(weight.reshape(o, k_dim)).astype(jnp.float32)       # [K, O]
    w_pad = jnp.pad(w2d, ((0, k_pad - k_dim), (0, o_pad - o))).astype(compute_dtype)
    b_pad = jnp.pad(bias.astype(jnp.float32), (0, o_pad - o)).reshape(1, o_pad)

    conv_shape = jax.ShapeDtypeStruct((m_pad, o_pad), jnp.float32)
    conv_spec = pl.BlockSpec((tm, o_pad), lambda i, kk: (i, 0))
    if bn:
        out_shape = (conv_shape,
                     jax.ShapeDtypeStruct((num_m * 8, o_pad), jnp.float32))
        out_specs = (conv_spec,
                     pl.BlockSpec((8, o_pad), lambda i, kk: (i, 0)))
    else:
        out_shape = conv_shape
        out_specs = conv_spec

    conv_call = pl.pallas_call(
        _make_conv_kernel(tm, m, o_pad, bn),
        out_shape=out_shape,
        grid=(num_m, num_k),
        in_specs=[
            pl.BlockSpec((tm, tk), lambda i, kk: (i, kk)),       # patches tile
            pl.BlockSpec((tk, o_pad), lambda i, kk: (kk, 0)),    # weight tile
            pl.BlockSpec((1, o_pad), lambda i, kk: (0, 0)),      # bias (resident)
        ],
        out_specs=out_specs,
        scratch_shapes=[pltpu.VMEM((tm, o_pad), jnp.float32)],
        compiler_params=pltpu.CompilerParams(
            dimension_semantics=("parallel", "arbitrary"),
            vmem_limit_bytes=_VMEM_LIMIT),
    )

    if bn:
        conv_out, stats = conv_call(p_pad, w_pad, b_pad)

        st = stats.reshape(num_m, 8, o_pad)
        s_total = jnp.sum(st[:, 0, :], axis=0)                   # (O_pad,)
        ss_total = jnp.sum(st[:, 1, :], axis=0)                  # (O_pad,)
        mean = s_total / m
        var = jnp.maximum(ss_total / m - mean * mean, 0.0)       # biased batch var
        gamma_pad = jnp.pad(gamma.astype(jnp.float32), (0, o_pad - o))
        beta_pad = jnp.pad(beta.astype(jnp.float32), (0, o_pad - o))
        scale = gamma_pad * lax.rsqrt(var + _EPS)
        shift = beta_pad - mean * scale

        out_flat = pl.pallas_call(
            _bn_apply_kernel,
            out_shape=jax.ShapeDtypeStruct((m_pad, o_pad), jnp.float32),
            grid=(num_m,),
            in_specs=[
                pl.BlockSpec((tm, o_pad), lambda i: (i, 0)),
                pl.BlockSpec((1, o_pad), lambda i: (0, 0)),
                pl.BlockSpec((1, o_pad), lambda i: (0, 0)),
            ],
            out_specs=pl.BlockSpec((tm, o_pad), lambda i: (i, 0)),
            compiler_params=pltpu.CompilerParams(
                dimension_semantics=("parallel",),
                vmem_limit_bytes=_VMEM_LIMIT),
        )(conv_out, scale.reshape(1, o_pad), shift.reshape(1, o_pad))
    else:
        out_flat = conv_call(p_pad, w_pad, b_pad)

    out = out_flat[:m, :o].reshape(n, ho, wo, o)                 # NHWC
    return jnp.transpose(out, (0, 3, 1, 2))                      # NCHW (single layout op)


# ---------------------------------------------------------------------------
# Pure-JAX reference (mirrors the PyTorch module, training-mode BN).
# ---------------------------------------------------------------------------
def _reference(x, weight, bias, gamma, beta, kernel_size, bn, eps=_EPS):
    kh, kw = kernel_size
    hh = lax.conv_general_dilated(
        x.astype(jnp.float32), weight.astype(jnp.float32),
        window_strides=(1, 1),
        padding=[(kh // 2, kh // 2), (kw // 2, kw // 2)],
        dimension_numbers=("NCHW", "OIHW", "NCHW"))
    hh = hh + bias.reshape(1, -1, 1, 1)
    if bn:
        mean = jnp.mean(hh, axis=(0, 2, 3), keepdims=True)
        var = jnp.mean(jnp.square(hh - mean), axis=(0, 2, 3), keepdims=True)
        hh = (hh - mean) * lax.rsqrt(var + eps)
        hh = hh * gamma.reshape(1, -1, 1, 1) + beta.reshape(1, -1, 1, 1)
    return hh


if __name__ == "__main__":
    # Small, deterministic setup: input_dim=4, output_dim=8, kernel_size=(3,3)
    N, C, H, W = 2, 4, 16, 16
    O = 8
    KS = (3, 3)

    key = jax.random.PRNGKey(0)
    kx, kw_, kb_, kg_, kbt_ = jax.random.split(key, 5)
    x = jax.random.normal(kx, (N, C, H, W), dtype=jnp.float32)
    weight = jax.random.normal(kw_, (O, C, KS[0], KS[1]), dtype=jnp.float32) * 0.1
    bias = jax.random.normal(kb_, (O,), dtype=jnp.float32) * 0.1
    gamma = 1.0 + 0.1 * jax.random.normal(kg_, (O,), dtype=jnp.float32)
    beta = 0.1 * jax.random.normal(kbt_, (O,), dtype=jnp.float32)

    # bf16-rounded copies for a tight-tolerance reference (kernel matmul uses bf16 inputs).
    x_bf = x.astype(jnp.bfloat16).astype(jnp.float32)
    w_bf = weight.astype(jnp.bfloat16).astype(jnp.float32)

    for bn_flag in (True, False):
        out = basic_conv2d(x, weight, bias, gamma, beta, kernel_size=KS, bn=bn_flag)
        out = jax.block_until_ready(out)
        assert out.shape == (N, O, H, W), out.shape

        ref_bf = _reference(x_bf, w_bf, bias, gamma, beta, KS, bn_flag)
        err_bf = float(jnp.max(jnp.abs(out - ref_bf)))
        assert jnp.allclose(out, ref_bf, atol=2e-3, rtol=2e-3), (bn_flag, err_bf)

        ref_f32 = _reference(x, weight, bias, gamma, beta, KS, bn_flag)
        err_f32 = float(jnp.max(jnp.abs(out - ref_f32)))
        assert jnp.allclose(out, ref_f32, atol=5e-2, rtol=5e-2), (bn_flag, err_f32)

    print("KERNEL_OK")
</pallas_src>

<mosaic_0001>
module attributes {stable_mosaic.version = 11 : i64} {
  func.func @kernel(%arg0: i32, %arg1: i32, %arg2: memref<256x128xbf16, #tpu.memory_space<vmem>>, %arg3: memref<128x128xbf16, #tpu.memory_space<vmem>>, %arg4: memref<1x128xf32, #tpu.memory_space<vmem>>, %arg5: memref<256x128xf32, #tpu.memory_space<vmem>>, %arg6: memref<8x128xf32, #tpu.memory_space<vmem>>, %arg7: memref<256x128xf32, #tpu.memory_space<vmem>>) attributes {dimension_semantics = [#tpu.dimension_semantics<parallel>, #tpu.dimension_semantics<arbitrary>], iteration_bounds = array<i64: 2, 1>, scalar_prefetch = 0 : i64, scratch_operands = 1 : i64, tpu.core_type = #tpu.core_type<tc>, window_params = [{transform_indices = @transform_0, window_bounds = array<i64: 256, 128>}, {transform_indices = @transform_1, window_bounds = array<i64: 128, 128>}, {pipeline_mode = #tpu.pipeline_mode<synchronous>, transform_indices = @transform_2, window_bounds = array<i64: 1, 128>}, {transform_indices = @transform_3, window_bounds = array<i64: 256, 128>}, {transform_indices = @transform_4, window_bounds = array<i64: 8, 128>}]} {
    %c0_i32 = arith.constant 0 : i32
    %0 = arith.cmpi eq, %arg1, %c0_i32 : i32
    %1 = arith.extui %0 : i1 to i32
    %c0_i32_0 = arith.constant 0 : i32
    %2 = arith.cmpi ne, %1, %c0_i32_0 : i32
    scf.if %2 {
      %cst_10 = arith.constant 0.000000e+00 : f32
      %12 = vector.broadcast %cst_10 : f32 to vector<256x128xf32>
      %c0_11 = arith.constant 0 : index
      %c0_12 = arith.constant 0 : index
      %13 = vector.load %arg7[%c0_11, %c0_12] : memref<256x128xf32, #tpu.memory_space<vmem>>, vector<256x128xf32>
      tpu.vector_store %arg7[%c0_11, %c0_12], %12 {strides = array<i32>} : memref<256x128xf32, #tpu.memory_space<vmem>>, vector<256x128xf32>,
    } else {
    }
    %c0 = arith.constant 0 : index
    %c0_1 = arith.constant 0 : index
    %3 = vector.load %arg7[%c0, %c0_1] : memref<256x128xf32, #tpu.memory_space<vmem>>, vector<256x128xf32>
    %c0_2 = arith.constant 0 : index
    %c0_3 = arith.constant 0 : index
    %4 = vector.load %arg2[%c0_2, %c0_3] : memref<256x128xbf16, #tpu.memory_space<vmem>>, vector<256x128xbf16>
    %c0_4 = arith.constant 0 : index
    %c0_5 = arith.constant 0 : index
    %5 = vector.load %arg3[%c0_4, %c0_5] : memref<128x128xbf16, #tpu.memory_space<vmem>>, vector<128x128xbf16>
    %cst = arith.constant dense<0.000000e+00> : vector<256x128xf32>
    %6 = tpu.matmul %4, %5, %cst {dimension_numbers = #tpu.dot_dimension_numbers<[1], [0], [0], [1], [0, 0, 1, 1], [], []>} : vector<256x128xbf16>, vector<128x128xbf16>, vector<256x128xf32> -> vector<256x128xf32>
    %7 = arith.addf %3, %6 : vector<256x128xf32>
    %c0_6 = arith.constant 0 : index
    %c0_7 = arith.constant 0 : index
    %8 = vector.load %arg7[%c0_6, %c0_7] : memref<256x128xf32, #tpu.memory_space<vmem>>, vector<256x128xf32>
    tpu.vector_store %arg7[%c0_6, %c0_7], %7 {strides = array<i32>} : memref<256x128xf32, #tpu.memory_space<vmem>>, vector<256x128xf32>,
    %c0_i32_8 = arith.constant 0 : i32
    %9 = arith.cmpi eq, %arg1, %c0_i32_8 : i32
    %10 = arith.extui %9 : i1 to i32
    %c0_i32_9 = arith.constant 0 : i32
    %11 = arith.cmpi ne, %10, %c0_i32_9 : i32
    scf.if %11 {
      %c0_10 = arith.constant 0 : index
      %c0_11 = arith.constant 0 : index
      %12 = vector.load %arg7[%c0_10, %c0_11] : memref<256x128xf32, #tpu.memory_space<vmem>>, vector<256x128xf32>
      %c0_12 = arith.constant 0 : index
      %c0_13 = arith.constant 0 : index
      %13 = vector.load %arg4[%c0_12, %c0_13] : memref<1x128xf32, #tpu.memory_space<vmem>>, vector<1x128xf32>
      %14 = vector.broadcast %13 : vector<1x128xf32> to vector<256x128xf32>
      %15 = arith.addf %12, %14 : vector<256x128xf32>
      %c0_14 = arith.constant 0 : index
      %c0_15 = arith.constant 0 : index
      %16 = vector.load %arg5[%c0_14, %c0_15] : memref<256x128xf32, #tpu.memory_space<vmem>>, vector<256x128xf32>
      tpu.vector_store %arg5[%c0_14, %c0_15], %15 {strides = array<i32>} : memref<256x128xf32, #tpu.memory_space<vmem>>, vector<256x128xf32>,
      %c256_i32 = arith.constant 256 : i32
      %17 = arith.muli %arg0, %c256_i32 : i32
      %18 = tpu.iota {dimensions = array<i32: 0>} : vector<256x128xi32>
      %19 = vector.broadcast %17 : i32 to vector<256x128xi32>
      %20 = arith.addi %19, %18 : vector<256x128xi32>
      %c512_i32 = arith.constant 512 : i32
      %21 = vector.broadcast %c512_i32 : i32 to vector<256x128xi32>
      %22 = arith.cmpi slt, %20, %21 : vector<256x128xi32>
      %cst_16 = arith.constant 0.000000e+00 : f32
      %23 = vector.broadcast %cst_16 : f32 to vector<256x128xf32>
      %24 = arith.select %22, %15, %23 : vector<256x128xi1>, vector<256x128xf32>
      %cst_17 = arith.constant dense<0.000000e+00> : vector<128xf32>
      %25 = vector.multi_reduction <add>, %24, %cst_17 [0] : vector<256x128xf32> to vector<128xf32>
      %26 = vector.shape_cast %25 : vector<128xf32> to vector<1x128xf32>
      %27 = arith.mulf %24, %24 : vector<256x128xf32>
      %cst_18 = arith.constant dense<0.000000e+00> : vector<128xf32>
      %28 = vector.multi_reduction <add>, %27, %cst_18 [0] : vector<256x128xf32> to vector<128xf32>
      %29 = vector.shape_cast %28 : vector<128xf32> to vector<1x128xf32>
      %30 = tpu.iota {dimensions = array<i32: 0>} : vector<8x128xi32>
      %c0_i32_19 = arith.constant 0 : i32
      %31 = vector.broadcast %c0_i32_19 : i32 to vector<8x128xi32>
      %32 = arith.cmpi eq, %30, %31 : vector<8x128xi32>
      %cst_20 = arith.constant 0.000000e+00 : f32
      %33 = vector.shape_cast %26 : vector<1x128xf32> to vector<1x128xf32>
      %34 = vector.broadcast %33 : vector<1x128xf32> to vector<8x128xf32>
      %35 = vector.broadcast %cst_20 : f32 to vector<8x128xf32>
      %36 = arith.select %32, %34, %35 : vector<8x128xi1>, vector<8x128xf32>
      %c1_i32 = arith.constant 1 : i32
      %37 = vector.broadcast %c1_i32 : i32 to vector<8x128xi32>
      %38 = arith.cmpi eq, %30, %37 : vector<8x128xi32>
      %cst_21 = arith.constant 0.000000e+00 : f32
      %39 = vector.shape_cast %29 : vector<1x128xf32> to vector<1x128xf32>
      %40 = vector.broadcast %39 : vector<1x128xf32> to vector<8x128xf32>
      %41 = vector.broadcast %cst_21 : f32 to vector<8x128xf32>
      %42 = arith.select %38, %40, %41 : vector<8x128xi1>, vector<8x128xf32>
      %43 = arith.addf %36, %42 : vector<8x128xf32>
      %c0_22 = arith.constant 0 : index
      %c0_23 = arith.constant 0 : index
      %44 = vector.load %arg6[%c0_22, %c0_23] : memref<8x128xf32, #tpu.memory_space<vmem>>, vector<8x128xf32>
      tpu.vector_store %arg6[%c0_22, %c0_23], %43 {strides = array<i32>} : memref<8x128xf32, #tpu.memory_space<vmem>>, vector<8x128xf32>,
    } else {
    }
    return
  }
  func.func @transform_0(%arg0: i32, %arg1: i32) -> (i32, i32) {
    %c0_i32 = arith.constant 0 : i32
    return %arg0, %arg1 : i32, i32
  }
  func.func @transform_1(%arg0: i32, %arg1: i32) -> (i32, i32) {
    %c0_i32 = arith.constant 0 : i32
    %c0_i32_0 = arith.constant 0 : i32
    return %arg1, %c0_i32 : i32, i32
  }
  func.func @transform_2(%arg0: i32, %arg1: i32) -> (i32, i32) {
    %c0_i32 = arith.constant 0 : i32
    %c0_i32_0 = arith.constant 0 : i32
    %c0_i32_1 = arith.constant 0 : i32
    return %c0_i32, %c0_i32_0 : i32, i32
  }
  func.func @transform_3(%arg0: i32, %arg1: i32) -> (i32, i32) {
    %c0_i32 = arith.constant 0 : i32
    %c0_i32_0 = arith.constant 0 : i32
    return %arg0, %c0_i32 : i32, i32
  }
  func.func @transform_4(%arg0: i32, %arg1: i32) -> (i32, i32) {
    %c0_i32 = arith.constant 0 : i32
    %c0_i32_0 = arith.constant 0 : i32
    return %arg0, %c0_i32 : i32, i32
  }
}

module attributes {stable_mosaic.version = 11 : i64} {
  func.func @_bn_apply_kernel(%arg0: i32, %arg1: memref<256x128xf32, #tpu.memory_space<vmem>>, %arg2: memref<1x128xf32, #tpu.memory_space<vmem>>, %arg3: memref<1x128xf32, #tpu.memory_space<vmem>>, %arg4: memref<256x128xf32, #tpu.memory_space<vmem>>) attributes {dimension_semantics = [#tpu.dimension_semantics<parallel>], iteration_bounds = array<i64: 2>, scalar_prefetch = 0 : i64, scratch_operands = 0 : i64, tpu.core_type = #tpu.core_type<tc>, window_params = [{transform_indices = @transform_0, window_bounds = array<i64: 256, 128>}, {pipeline_mode = #tpu.pipeline_mode<synchronous>, transform_indices = @transform_1, window_bounds = array<i64: 1, 128>}, {pipeline_mode = #tpu.pipeline_mode<synchronous>, transform_indices = @transform_2, window_bounds = array<i64: 1, 128>}, {transform_indices = @transform_3, window_bounds = array<i64: 256, 128>}]} {
    %c0 = arith.constant 0 : index
    %c0_0 = arith.constant 0 : index
    %0 = vector.load %arg1[%c0, %c0_0] : memref<256x128xf32, #tpu.memory_space<vmem>>, vector<256x128xf32>
    %c0_1 = arith.constant 0 : index
    %c0_2 = arith.constant 0 : index
    %1 = vector.load %arg2[%c0_1, %c0_2] : memref<1x128xf32, #tpu.memory_space<vmem>>, vector<1x128xf32>
    %2 = vector.broadcast %1 : vector<1x128xf32> to vector<256x128xf32>
    %3 = arith.mulf %0, %2 : vector<256x128xf32>
    %c0_3 = arith.constant 0 : index
    %c0_4 = arith.constant 0 : index
    %4 = vector.load %arg3[%c0_3, %c0_4] : memref<1x128xf32, #tpu.memory_space<vmem>>, vector<1x128xf32>
    %5 = vector.broadcast %4 : vector<1x128xf32> to vector<256x128xf32>
    %6 = arith.addf %3, %5 : vector<256x128xf32>
    %c0_5 = arith.constant 0 : index
    %c0_6 = arith.constant 0 : index
    %7 = vector.load %arg4[%c0_5, %c0_6] : memref<256x128xf32, #tpu.memory_space<vmem>>, vector<256x128xf32>
    tpu.vector_store %arg4[%c0_5, %c0_6], %6 {strides = array<i32>} : memref<256x128xf32, #tpu.memory_space<vmem>>, vector<256x128xf32>,
    return
  }
  func.func @transform_0(%arg0: i32) -> (i32, i32) {
    %c0_i32 = arith.constant 0 : i32
    %c0_i32_0 = arith.constant 0 : i32
    return %arg0, %c0_i32 : i32, i32
  }
  func.func @transform_1(%arg0: i32) -> (i32, i32) {
    %c0_i32 = arith.constant 0 : i32
    %c0_i32_0 = arith.constant 0 : i32
    %c0_i32_1 = arith.constant 0 : i32
    return %c0_i32, %c0_i32_0 : i32, i32
  }
  func.func @transform_2(%arg0: i32) -> (i32, i32) {
    %c0_i32 = arith.constant 0 : i32
    %c0_i32_0 = arith.constant 0 : i32
    %c0_i32_1 = arith.constant 0 : i32
    return %c0_i32, %c0_i32_0 : i32, i32
  }
  func.func @transform_3(%arg0: i32) -> (i32, i32) {
    %c0_i32 = arith.constant 0 : i32
    %c0_i32_0 = arith.constant 0 : i32
    return %arg0, %c0_i32 : i32, i32
  }
}

</mosaic_0001>

<llo_original>
// kernel: basic_conv2d.3
$region0: #{basic_conv2d.3}
  #allocation0 [shape = 'u32[]', space=smem, size = 0x4, offset = 0x4, fixed_abs, tag = 'smem constant byte address 0x4 - core index']
  #allocation1 [shape = 'u32[144,128]{1,0:T(1,128)}', space=vmem, size = 0x12000, scoped, tag = 'internal scratch']
  %s0 = inlined_call_operand.vmem [shape: f32[512,128], index: 0, kind: input, shape index: {}]
  %s1 = inlined_call_operand.vmem [shape: f32[1,128], index: 1, kind: input, shape index: {}]
  %s2 = inlined_call_operand.vmem [shape: f32[1,128], index: 2, kind: input, shape index: {}]
  %s3 = inlined_call_operand.vmem [shape: f32[512,128], index: 3, kind: output, shape index: {}]
  %s4 = sld [smem:[#allocation0]]
  $region45: #{basic_conv2d.3} parent=0
    _
  %s6 = ssub.s32 1, %s4
  %s7 = scalar_select 0, %s6, %s4
  loop: start=0, step=1, limit=4
  $region2: #{basic_conv2d.3} parent=0 // loop_pre_header
    _
  $region3: #{basic_conv2d.3} parent=0 // loop_header
    %s9 = sphi 0, %s13
    %p10 = scmp.ge.s32.totalorder %s9, 4
    %s19 = sphi 0, %s21
    %s22 = sphi 0, %s19
    %s23 = sphi 0, %s22
    %s39 = sphi 0, %s23
    %s43 = sphi 0, %s43
    %s45 = sphi 0, %s43
    %s46 = sphi 0, %s45
    %s60 = sphi 0, %s46
    %s64 = sphi 0, %s64
    %s66 = sphi 0, %s64
    %s67 = sphi 0, %s66
    %s81 = sphi 0, %s67
    %s87 = sphi 0, %s89
    %s90 = sphi 0, %s87
    %s91 = sphi 0, %s90
    %s107 = sphi 0, %s91
  $region4: #{basic_conv2d.3} parent=0 // loop_header_branch
    %12 = sbr.rel (%p10) target = $region8
  $region5: #{basic_conv2d.3} parent=0 // loop_body
    %s14 = ssub.s32 %s9, 1
    %s15 = ssub.s32 %s9, 2
    %s16 = sadd.s32 %s9, 1
    %s17 = ssub.s32 %s9, %s16
    %p18 = scmp.eq.s32.totalorder %s17, 0
    %s20 = sadd.s32 %s19, 1
    %s21 = scalar_select %p18, %s19, %s20
    %p24 = pneg %p18
    %p25 = scmp.eq.s32.totalorder %s9, 1
    %p26 = por %p24, %p25
    %p27 = scmp.ne.s32.totalorder %s19, %s22
    %p28 = scmp.eq.s32.totalorder %s9, 0
    %p29 = por %p27, %p28
    %p30 = scmp.ne.s32.totalorder %s19, %s22
    %p31 = scmp.eq.s32.totalorder %s14, 1
    %p32 = por %p30, %p31
    %p33 = scmp.ne.s32.totalorder %s22, %s23
    %p34 = scmp.eq.s32.totalorder %s14, 0
    %p35 = por %p33, %p34
    %p36 = scmp.ne.s32.totalorder %s22, %s23
    %p37 = scmp.eq.s32.totalorder %s15, 1
    %p38 = por %p36, %p37
    %p40 = scmp.ne.s32.totalorder %s23, %s39
    %p41 = scmp.eq.s32.totalorder %s15, 0
    %p42 = por %p40, %p41
    %s44 = sadd.s32 %s43, 1
    %p47 = scmp.eq.s32.totalorder %s9, 1
    %p48 = scmp.ne.s32.totalorder %s43, %s45
    %p49 = scmp.eq.s32.totalorder %s9, 0
    %p50 = por %p48, %p49
    %p51 = scmp.ne.s32.totalorder %s43, %s45
    %p52 = scmp.eq.s32.totalorder %s14, 1
    %p53 = por %p51, %p52
    %p54 = scmp.ne.s32.totalorder %s45, %s46
    %p55 = scmp.eq.s32.totalorder %s14, 0
    %p56 = por %p54, %p55
    %p57 = scmp.ne.s32.totalorder %s45, %s46
    %p58 = scmp.eq.s32.totalorder %s15, 1
    %p59 = por %p57, %p58
    %p61 = scmp.ne.s32.totalorder %s46, %s60
    %p62 = scmp.eq.s32.totalorder %s15, 0
    %p63 = por %p61, %p62
    %s65 = sadd.s32 %s64, 1
    %p68 = scmp.eq.s32.totalorder %s9, 1
    %p69 = scmp.ne.s32.totalorder %s64, %s66
    %p70 = scmp.eq.s32.totalorder %s9, 0
    %p71 = por %p69, %p70
    %p72 = scmp.ne.s32.totalorder %s64, %s66
    %p73 = scmp.eq.s32.totalorder %s14, 1
    %p74 = por %p72, %p73
    %p75 = scmp.ne.s32.totalorder %s66, %s67
    %p76 = scmp.eq.s32.totalorder %s14, 0
    %p77 = por %p75, %p76
    %p78 = scmp.ne.s32.totalorder %s66, %s67
    %p79 = scmp.eq.s32.totalorder %s15, 1
    %p80 = por %p78, %p79
    %p82 = scmp.ne.s32.totalorder %s67, %s81
    %p83 = scmp.eq.s32.totalorder %s15, 0
    %p84 = por %p82, %p83
    %s85 = ssub.s32 %s9, %s16
    %p86 = scmp.eq.s32.totalorder %s85, 0
    %s88 = sadd.s32 %s87, 1
    %s89 = scalar_select %p86, %s87, %s88
    %p92 = pneg %p86
    %p93 = scmp.eq.s32.totalorder %s9, 1
    %p94 = por %p92, %p93
    %p95 = scmp.ne.s32.totalorder %s87, %s90
    %p96 = scmp.eq.s32.totalorder %s9, 0
    %p97 = por %p95, %p96
    %p98 = scmp.ne.s32.totalorder %s87, %s90
    %p99 = scmp.eq.s32.totalorder %s14, 1
    %p100 = por %p98, %p99
    %p101 = scmp.ne.s32.totalorder %s90, %s91
    %p102 = scmp.eq.s32.totalorder %s14, 0
    %p103 = por %p101, %p102
    %p104 = scmp.ne.s32.totalorder %s90, %s91
    %p105 = scmp.eq.s32.totalorder %s15, 1
    %p106 = por %p104, %p105
    %p108 = scmp.ne.s32.totalorder %s91, %s107
    %p109 = scmp.eq.s32.totalorder %s15, 0
    %p110 = por %p108, %p109
    %p111 = scmp.le.s32.totalorder 1, %s9
    %p112 = scmp.lt.s32.totalorder %s9, 3
    %p113 = pnand %p111, %p112
    %p114 = pneg %p113
    // Predicated region
    $region9: #{basic_conv2d.3} parent=5 // pred_check
      _
    $region10: #{basic_conv2d.3} parent=5 // pred_check_branch
      %116 = sbr.rel (%p113) target = $region12
    $region11: #{basic_conv2d.3} parent=5 // pred_region
      %s117 = ssub.s32 %s9, 1
      // Predicated region
      $region13: #{basic_conv2d.3} parent=11 // pred_check
        %p118 = pneg %p56
      $region14: #{basic_conv2d.3} parent=11 // pred_check_branch
        %120 = sbr.rel (%p118) target = $region16
      $region15: #{basic_conv2d.3} parent=11 // pred_region
        _
      $region16: #{basic_conv2d.3} parent=11 // pred_fallthru
        _
      // Predicated region
      $region17: #{basic_conv2d.3} parent=11 // pred_check
        %p121 = pneg %p77
      $region18: #{basic_conv2d.3} parent=11 // pred_check_branch
        %123 = sbr.rel (%p121) target = $region20
      $region19: #{basic_conv2d.3} parent=11 // pred_region
        _
      $region20: #{basic_conv2d.3} parent=11 // pred_fallthru
        _
    $region12: #{basic_conv2d.3} parent=5 // pred_fallthru
      _
    %p124 = scmp.lt.s32.totalorder %s9, 2
    // Predicated region
    $region21: #{basic_conv2d.3} parent=5 // pred_check
      %p125 = pneg %p124
    $region22: #{basic_conv2d.3} parent=5 // pred_check_branch
      %127 = sbr.rel (%p125) target = $region24
    $region23: #{basic_conv2d.3} parent=5 // pred_region
      // Predicated region
      $region25: #{basic_conv2d.3} parent=23 // pred_check
        %p128 = pneg %p29
      $region26: #{basic_conv2d.3} parent=23 // pred_check_branch
        %130 = sbr.rel (%p128) target = $region28
      $region27: #{basic_conv2d.3} parent=23 // pred_region
        %s131 = smul.u32 32, %s9
        %p132 = scmp.lt.s32.totalorder %s131, 63
        %s133 = scalar_select %p132, %s131, 63
        %s134 = smul.addr %s133, 8
        %s135 = scalar_lea.vmem %s0, %s134
        %s136 = smul.u32 32, %s9
      $region28: #{basic_conv2d.3} parent=23 // pred_fallthru
        _
    $region24: #{basic_conv2d.3} parent=5 // pred_fallthru
      _
    %p137 = scmp.le.s32.totalorder 1, %s9
    %p138 = scmp.lt.s32.totalorder %s9, 3
    %p139 = pnand %p137, %p138
    %p140 = pneg %p139
    // Predicated region
    $region29: #{basic_conv2d.3} parent=5 // pred_check
      _
    $region30: #{basic_conv2d.3} parent=5 // pred_check_branch
      %142 = sbr.rel (%p139) target = $region32
    $region31: #{basic_conv2d.3} parent=5 // pred_region
      %s143 = ssub.s32 %s9, 1
      %s144 = smul.u32 32, %s14
      %p145 = scmp.lt.s32.totalorder %s144, 63
      %s146 = scalar_select %p145, %s144, 63
      %s147 = smul.addr %s146, 8
      %s148 = scalar_lea.vmem %s0, %s147
      %p149 = pneg %p35
      %p150 = pneg %p32
      %p151 = pneg %p56
      %p152 = pneg %p53
      %p153 = pneg %p77
      %p154 = pneg %p74
      %p155 = pneg %p103
      %p156 = pneg %p100
      %s157 = smul.u32 32, %s14
      %p158 = scmp.lt.s32.totalorder %s157, 63
      %s159 = scalar_select %p158, %s157, 63
      %s160 = smul.addr %s159, 8
      %s161 = scalar_lea.vmem %s3, %s160
      %s162 = smul.u32 32, %s14
      %p163 = scmp.lt.s32.totalorder %s162, 63
      %s164 = scalar_select %p163, %s162, 63
      %s165 = smul.addr %s164, 8
      %s166 = scalar_lea.vmem %s0, %s165
      %s167 = smul.u32 32, %s14
      %s168 = smul.u32 32, %s14
      %p169 = scmp.lt.s32.totalorder %s168, 63
      %s170 = scalar_select %p169, %s168, 63
      %s171 = smul.addr %s170, 8
      %s172 = scalar_lea.vmem %s3, %s171
      %s173 = smul.u32 32, %s14
      %v174 = vld [vmem:[%s166] sm:$0xff]
      %v175 = vld [vmem:[%s166 + $0x8] sm:$0xff]
      %v176 = vld [vmem:[%s166 + $0x10] sm:$0xff]
      %v177 = vld [vmem:[%s166 + $0x18] sm:$0xff]
      %v178 = vld [vmem:[%s166 + $0x20] sm:$0xff]
      %v179 = vld [vmem:[%s166 + $0x28] sm:$0xff]
      %v180 = vld [vmem:[%s166 + $0x30] sm:$0xff]
      %v181 = vld [vmem:[%s166 + $0x38] sm:$0xff]
      %v182 = vld [vmem:[%s166 + $0x40] sm:$0xff]
      %v183 = vld [vmem:[%s166 + $0x48] sm:$0xff]
      %v184 = vld [vmem:[%s166 + $0x50] sm:$0xff]
      %v185 = vld [vmem:[%s166 + $0x58] sm:$0xff]
      %v186 = vld [vmem:[%s166 + $0x60] sm:$0xff]
      %v187 = vld [vmem:[%s166 + $0x68] sm:$0xff]
      %v188 = vld [vmem:[%s166 + $0x70] sm:$0xff]
      %v189 = vld [vmem:[%s166 + $0x78] sm:$0xff]
      %v190 = vld [vmem:[%s166 + $0x80] sm:$0xff]
      %v191 = vld [vmem:[%s166 + $0x88] sm:$0xff]
      %v192 = vld [vmem:[%s166 + $0x90] sm:$0xff]
      %v193 = vld [vmem:[%s166 + $0x98] sm:$0xff]
      %v194 = vld [vmem:[%s166 + $0xa0] sm:$0xff]
      %v195 = vld [vmem:[%s166 + $0xa8] sm:$0xff]
      %v196 = vld [vmem:[%s166 + $0xb0] sm:$0xff]
      %v197 = vld [vmem:[%s166 + $0xb8] sm:$0xff]
      %v198 = vld [vmem:[%s166 + $0xc0] sm:$0xff]
      %v199 = vld [vmem:[%s166 + $0xc8] sm:$0xff]
      %v200 = vld [vmem:[%s166 + $0xd0] sm:$0xff]
      %v201 = vld [vmem:[%s166 + $0xd8] sm:$0xff]
      %v202 = vld [vmem:[%s166 + $0xe0] sm:$0xff]
      %v203 = vld [vmem:[%s166 + $0xe8] sm:$0xff]
      %v204 = vld [vmem:[%s166 + $0xf0] sm:$0xff]
      %v205 = vld [vmem:[%s166 + $0xf8] sm:$0xff]
      %v206 = vld [vmem:[%s1] sm:$0x1]
      %v208 = vlaneseq
      %v209 = vshrl.u32 %v208, 7
      %v210 = vsub.s32 0, %v209
      %v211 = vrot.slane %v206, %v210
      %v213 = vmul.f32 %v174, %v211
      %v214 = vmul.f32 %v175, %v211
      %v215 = vmul.f32 %v176, %v211
      %v216 = vmul.f32 %v177, %v211
      %v217 = vmul.f32 %v178, %v211
      %v218 = vmul.f32 %v179, %v211
      %v219 = vmul.f32 %v180, %v211
      %v220 = vmul.f32 %v181, %v211
      %v221 = vmul.f32 %v182, %v211
      %v222 = vmul.f32 %v183, %v211
      %v223 = vmul.f32 %v184, %v211
      %v224 = vmul.f32 %v185, %v211
      %v225 = vmul.f32 %v186, %v211
      %v226 = vmul.f32 %v187, %v211
      %v227 = vmul.f32 %v188, %v211
      %v228 = vmul.f32 %v189, %v211
      %v229 = vmul.f32 %v190, %v211
      %v230 = vmul.f32 %v191, %v211
      %v231 = vmul.f32 %v192, %v211
      %v232 = vmul.f32 %v193, %v211
      %v233 = vmul.f32 %v194, %v211
      %v234 = vmul.f32 %v195, %v211
      %v235 = vmul.f32 %v196, %v211
      %v236 = vmul.f32 %v197, %v211
      %v237 = vmul.f32 %v198, %v211
      %v238 = vmul.f32 %v199, %v211
      %v239 = vmul.f32 %v200, %v211
      %v240 = vmul.f32 %v201, %v211
      %v241 = vmul.f32 %v202, %v211
      %v242 = vmul.f32 %v203, %v211
      %v243 = vmul.f32 %v204, %v211
      %v244 = vmul.f32 %v205, %v211
      %v245 = vld [vmem:[%s2] sm:$0x1]
      %v247 = vlaneseq
      %v248 = vshrl.u32 %v247, 7
      %v249 = vsub.s32 0, %v248
      %v250 = vrot.slane %v245, %v249
      %v252 = vadd.f32 %v213, %v250
      %v253 = vadd.f32 %v214, %v250
      %v254 = vadd.f32 %v215, %v250
      %v255 = vadd.f32 %v216, %v250
      %v256 = vadd.f32 %v217, %v250
      %v257 = vadd.f32 %v218, %v250
      %v258 = vadd.f32 %v219, %v250
      %v259 = vadd.f32 %v220, %v250
      %v260 = vadd.f32 %v221, %v250
      %v261 = vadd.f32 %v222, %v250
      %v262 = vadd.f32 %v223, %v250
      %v263 = vadd.f32 %v224, %v250
      %v264 = vadd.f32 %v225, %v250
      %v265 = vadd.f32 %v226, %v250
      %v266 = vadd.f32 %v227, %v250
      %v267 = vadd.f32 %v228, %v250
      %v268 = vadd.f32 %v229, %v250
      %v269 = vadd.f32 %v230, %v250
      %v270 = vadd.f32 %v231, %v250
      %v271 = vadd.f32 %v232, %v250
      %v272 = vadd.f32 %v233, %v250
      %v273 = vadd.f32 %v234, %v250
      %v274 = vadd.f32 %v235, %v250
      %v275 = vadd.f32 %v236, %v250
      %v276 = vadd.f32 %v237, %v250
      %v277 = vadd.f32 %v238, %v250
      %v278 = vadd.f32 %v239, %v250
      %v279 = vadd.f32 %v240, %v250
      %v280 = vadd.f32 %v241, %v250
      %v281 = vadd.f32 %v242, %v250
      %v282 = vadd.f32 %v243, %v250
      %v283 = vadd.f32 %v244, %v250
      %284 = vst [vmem:[%s172] sm:$0xff] %v252
      %285 = vst [vmem:[%s172 + $0x8] sm:$0xff] %v253
      %286 = vst [vmem:[%s172 + $0x10] sm:$0xff] %v254
      %287 = vst [vmem:[%s172 + $0x18] sm:$0xff] %v255
      %288 = vst [vmem:[%s172 + $0x20] sm:$0xff] %v256
      %289 = vst [vmem:[%s172 + $0x28] sm:$0xff] %v257
      %290 = vst [vmem:[%s172 + $0x30] sm:$0xff] %v258
      %291 = vst [vmem:[%s172 + $0x38] sm:$0xff] %v259
      %292 = vst [vmem:[%s172 + $0x40] sm:$0xff] %v260
      %293 = vst [vmem:[%s172 + $0x48] sm:$0xff] %v261
      %294 = vst [vmem:[%s172 + $0x50] sm:$0xff] %v262
      %295 = vst [vmem:[%s172 + $0x58] sm:$0xff] %v263
      %296 = vst [vmem:[%s172 + $0x60] sm:$0xff] %v264
      %297 = vst [vmem:[%s172 + $0x68] sm:$0xff] %v265
      %298 = vst [vmem:[%s172 + $0x70] sm:$0xff] %v266
      %299 = vst [vmem:[%s172 + $0x78] sm:$0xff] %v267
      %300 = vst [vmem:[%s172 + $0x80] sm:$0xff] %v268
      %301 = vst [vmem:[%s172 + $0x88] sm:$0xff] %v269
      %302 = vst [vmem:[%s172 + $0x90] sm:$0xff] %v270
      %303 = vst [vmem:[%s172 + $0x98] sm:$0xff] %v271
      %304 = vst [vmem:[%s172 + $0xa0] sm:$0xff] %v272
      %305 = vst [vmem:[%s172 + $0xa8] sm:$0xff] %v273
      %306 = vst [vmem:[%s172 + $0xb0] sm:$0xff] %v274
      %307 = vst [vmem:[%s172 + $0xb8] sm:$0xff] %v275
      %308 = vst [vmem:[%s172 + $0xc0] sm:$0xff] %v276
      %309 = vst [vmem:[%s172 + $0xc8] sm:$0xff] %v277
      %310 = vst [vmem:[%s172 + $0xd0] sm:$0xff] %v278
      %311 = vst [vmem:[%s172 + $0xd8] sm:$0xff] %v279
      %312 = vst [vmem:[%s172 + $0xe0] sm:$0xff] %v280
      %313 = vst [vmem:[%s172 + $0xe8] sm:$0xff] %v281
      %314 = vst [vmem:[%s172 + $0xf0] sm:$0xff] %v282
      %315 = vst [vmem:[%s172 + $0xf8] sm:$0xff] %v283
      %s316 = smul.u32 32, %s14
      %p317 = scmp.lt.s32.totalorder %s316, 63
      %s318 = scalar_select %p317, %s316, 63
      %s319 = smul.addr %s318, 8
      %s320 = scalar_lea.vmem %s3, %s319
      // Predicated region
      $region33: #{basic_conv2d.3} parent=31 // pred_check
        %p321 = pneg %p100
      $region34: #{basic_conv2d.3} parent=31 // pred_check_branch
        %323 = sbr.rel (%p321) target = $region36
      $region35: #{basic_conv2d.3} parent=31 // pred_region
        %s324 = smul.u32 32, %s14
      $region36: #{basic_conv2d.3} parent=31 // pred_fallthru
        _
    $region32: #{basic_conv2d.3} parent=5 // pred_fallthru
      _
    %p325 = scmp.le.s32.totalorder 2, %s9
    // Predicated region
    $region37: #{basic_conv2d.3} parent=5 // pred_check
      %p326 = pneg %p325
    $region38: #{basic_conv2d.3} parent=5 // pred_check_branch
      %328 = sbr.rel (%p326) target = $region40
    $region39: #{basic_conv2d.3} parent=5 // pred_region
      %s329 = ssub.s32 %s9, 2
      // Predicated region
      $region41: #{basic_conv2d.3} parent=39 // pred_check
        %p330 = pneg %p106
      $region42: #{basic_conv2d.3} parent=39 // pred_check_branch
        %332 = sbr.rel (%p330) target = $region44
      $region43: #{basic_conv2d.3} parent=39 // pred_region
        %s333 = smul.u32 32, %s15
        %p334 = scmp.lt.s32.totalorder %s333, 63
        %s335 = scalar_select %p334, %s333, 63
        %s336 = smul.addr %s335, 8
        %s337 = scalar_lea.vmem %s3, %s336
      $region44: #{basic_conv2d.3} parent=39 // pred_fallthru
        _
    $region40: #{basic_conv2d.3} parent=5 // pred_fallthru
      _
  $region6: #{basic_conv2d.3} parent=0 // loop_footer
    %s13 = sadd.s32 1, %s9
  $region7: #{basic_conv2d.3} parent=0 // loop_footer_branch
    %8 = sbr.rel target = $region3
  $region8: #{basic_conv2d.3} parent=0 // loop_exit
    _

// kernel: basic_conv2d.2
$region0: #{basic_conv2d.2}
  #allocation0 [shape = 'u32[]', space=smem, size = 0x4, offset = 0x4, fixed_abs, tag = 'smem constant byte address 0x4 - core index']
  #allocation1 [shape = 'u32[144,128]{1,0:T(1,128)}', space=vmem, size = 0x12000, scoped, tag = 'internal scratch']
  #allocation2 [shape = 'f32[256,128]{1,0:T(8,128)}', space=vmem, size = 0x20000, scoped, tag = 'scratch operand']
  %s0 = inlined_call_operand.vmem [shape: bf16[512,128], index: 0, kind: input, shape index: {}]
  %s1 = inlined_call_operand.vmem [shape: bf16[128,128], index: 1, kind: input, shape index: {}]
  %s2 = inlined_call_operand.vmem [shape: f32[1,128], index: 2, kind: input, shape index: {}]
  %s3 = inlined_call_operand.vmem [shape: f32[512,128], index: 3, kind: output, shape index: {0}]
  %s4 = inlined_call_operand.vmem [shape: f32[16,128], index: 4, kind: output, shape index: {1}]
  %5 = xla_tuple %s3, %s4
  %s6 = sld [smem:[#allocation0]]
  $region61: #{basic_conv2d.2} parent=0
    _
  %s8 = ssub.s32 1, %s6
  %s9 = scalar_select 0, %s8, %s6
  loop: start=0, step=1, limit=4
  $region2: #{basic_conv2d.2} parent=0 // loop_pre_header
    _
  $region3: #{basic_conv2d.2} parent=0 // loop_header
    %s11 = sphi 0, %s15
    %p12 = scmp.ge.s32.totalorder %s11, 4
    %s18 = sphi 0, %s30
    %s19 = sphi 0, %s26
    %s20 = sphi 0, %s18
    %s21 = sphi 0, %s19
    %s22 = sphi 0, %s20
    %s23 = sphi 0, %s21
    %s35 = sphi 0, %s37
    %s38 = sphi 0, %s35
    %s39 = sphi 0, %s38
    %s55 = sphi 0, %s39
    %s61 = sphi 0, %s63
    %s64 = sphi 0, %s61
    %s65 = sphi 0, %s64
    %s81 = sphi 0, %s65
    %s85 = sphi 0, %s85
    %s87 = sphi 0, %s85
    %s88 = sphi 0, %s87
    %s102 = sphi 0, %s88
    %s108 = sphi 0, %s110
    %s111 = sphi 0, %s108
    %s112 = sphi 0, %s111
    %s128 = sphi 0, %s112
    %s134 = sphi 0, %s136
    %s137 = sphi 0, %s134
    %s138 = sphi 0, %s137
    %s154 = sphi 0, %s138
  $region4: #{basic_conv2d.2} parent=0 // loop_header_branch
    %14 = sbr.rel (%p12) target = $region8
  $region5: #{basic_conv2d.2} parent=0 // loop_body
    %s16 = ssub.s32 %s11, 1
    %s17 = ssub.s32 %s11, 2
    %s24 = sadd.s32 1, %s19
    %p25 = scmp.ge.s32.totalorder %s24, 1
    %s26 = scalar_select %p25, 0, %s24
    %s27 = sadd.s32 1, %s18
    %s28 = scalar_select %p25, %s27, %s18
    %p29 = scmp.ge.s32.totalorder %s28, 2
    %s30 = scalar_select %p29, 0, %s28
    %s31 = ssub.s32 %s18, %s30
    %s32 = ssub.s32 %s19, %s26
    %s33 = sor.u32 %s31, %s32
    %p34 = scmp.eq.s32.totalorder %s33, 0
    %s36 = sadd.s32 %s35, 1
    %s37 = scalar_select %p34, %s35, %s36
    %p40 = pneg %p34
    %p41 = scmp.eq.s32.totalorder %s11, 1
    %p42 = por %p40, %p41
    %p43 = scmp.ne.s32.totalorder %s35, %s38
    %p44 = scmp.eq.s32.totalorder %s11, 0
    %p45 = por %p43, %p44
    %p46 = scmp.ne.s32.totalorder %s35, %s38
    %p47 = scmp.eq.s32.totalorder %s16, 1
    %p48 = por %p46, %p47
    %p49 = scmp.ne.s32.totalorder %s38, %s39
    %p50 = scmp.eq.s32.totalorder %s16, 0
    %p51 = por %p49, %p50
    %p52 = scmp.ne.s32.totalorder %s38, %s39
    %p53 = scmp.eq.s32.totalorder %s17, 1
    %p54 = por %p52, %p53
    %p56 = scmp.ne.s32.totalorder %s39, %s55
    %p57 = scmp.eq.s32.totalorder %s17, 0
    %p58 = por %p56, %p57
    %s59 = ssub.s32 %s19, %s26
    %p60 = scmp.eq.s32.totalorder %s59, 0
    %s62 = sadd.s32 %s61, 1
    %s63 = scalar_select %p60, %s61, %s62
    %p66 = pneg %p60
    %p67 = scmp.eq.s32.totalorder %s11, 1
    %p68 = por %p66, %p67
    %p69 = scmp.ne.s32.totalorder %s61, %s64
    %p70 = scmp.eq.s32.totalorder %s11, 0
    %p71 = por %p69, %p70
    %p72 = scmp.ne.s32.totalorder %s61, %s64
    %p73 = scmp.eq.s32.totalorder %s16, 1
    %p74 = por %p72, %p73
    %p75 = scmp.ne.s32.totalorder %s64, %s65
    %p76 = scmp.eq.s32.totalorder %s16, 0
    %p77 = por %p75, %p76
    %p78 = scmp.ne.s32.totalorder %s64, %s65
    %p79 = scmp.eq.s32.totalorder %s17, 1
    %p80 = por %p78, %p79
    %p82 = scmp.ne.s32.totalorder %s65, %s81
    %p83 = scmp.eq.s32.totalorder %s17, 0
    %p84 = por %p82, %p83
    %s86 = sadd.s32 %s85, 1
    %p89 = scmp.eq.s32.totalorder %s11, 1
    %p90 = scmp.ne.s32.totalorder %s85, %s87
    %p91 = scmp.eq.s32.totalorder %s11, 0
    %p92 = por %p90, %p91
    %p93 = scmp.ne.s32.totalorder %s85, %s87
    %p94 = scmp.eq.s32.totalorder %s16, 1
    %p95 = por %p93, %p94
    %p96 = scmp.ne.s32.totalorder %s87, %s88
    %p97 = scmp.eq.s32.totalorder %s16, 0
    %p98 = por %p96, %p97
    %p99 = scmp.ne.s32.totalorder %s87, %s88
    %p100 = scmp.eq.s32.totalorder %s17, 1
    %p101 = por %p99, %p100
    %p103 = scmp.ne.s32.totalorder %s88, %s102
    %p104 = scmp.eq.s32.totalorder %s17, 0
    %p105 = por %p103, %p104
    %s106 = ssub.s32 %s18, %s30
    %p107 = scmp.eq.s32.totalorder %s106, 0
    %s109 = sadd.s32 %s108, 1
    %s110 = scalar_select %p107, %s108, %s109
    %p113 = pneg %p107
    %p114 = scmp.eq.s32.totalorder %s11, 1
    %p115 = por %p113, %p114
    %p116 = scmp.ne.s32.totalorder %s108, %s111
    %p117 = scmp.eq.s32.totalorder %s11, 0
    %p118 = por %p116, %p117
    %p119 = scmp.ne.s32.totalorder %s108, %s111
    %p120 = scmp.eq.s32.totalorder %s16, 1
    %p121 = por %p119, %p120
    %p122 = scmp.ne.s32.totalorder %s111, %s112
    %p123 = scmp.eq.s32.totalorder %s16, 0
    %p124 = por %p122, %p123
    %p125 = scmp.ne.s32.totalorder %s111, %s112
    %p126 = scmp.eq.s32.totalorder %s17, 1
    %p127 = por %p125, %p126
    %p129 = scmp.ne.s32.totalorder %s112, %s128
    %p130 = scmp.eq.s32.totalorder %s17, 0
    %p131 = por %p129, %p130
    %s132 = ssub.s32 %s18, %s30
    %p133 = scmp.eq.s32.totalorder %s132, 0
    %s135 = sadd.s32 %s134, 1
    %s136 = scalar_select %p133, %s134, %s135
    %p139 = pneg %p133
    %p140 = scmp.eq.s32.totalorder %s11, 1
    %p141 = por %p139, %p140
    %p142 = scmp.ne.s32.totalorder %s134, %s137
    %p143 = scmp.eq.s32.totalorder %s11, 0
    %p144 = por %p142, %p143
    %p145 = scmp.ne.s32.totalorder %s134, %s137
    %p146 = scmp.eq.s32.totalorder %s16, 1
    %p147 = por %p145, %p146
    %p148 = scmp.ne.s32.totalorder %s137, %s138
    %p149 = scmp.eq.s32.totalorder %s16, 0
    %p150 = por %p148, %p149
    %p151 = scmp.ne.s32.totalorder %s137, %s138
    %p152 = scmp.eq.s32.totalorder %s17, 1
    %p153 = por %p151, %p152
    %p155 = scmp.ne.s32.totalorder %s138, %s154
    %p156 = scmp.eq.s32.totalorder %s17, 0
    %p157 = por %p155, %p156
    %p158 = scmp.le.s32.totalorder 1, %s11
    %p159 = scmp.lt.s32.totalorder %s11, 3
    %p160 = pnand %p158, %p159
    %p161 = pneg %p160
    // Predicated region
    $region9: #{basic_conv2d.2} parent=5 // pred_check
      _
    $region10: #{basic_conv2d.2} parent=5 // pred_check_branch
      %163 = sbr.rel (%p160) target = $region12
    $region11: #{basic_conv2d.2} parent=5 // pred_region
      %s164 = ssub.s32 %s11, 1
      // Predicated region
      $region13: #{basic_conv2d.2} parent=11 // pred_check
        %p165 = pneg %p77
      $region14: #{basic_conv2d.2} parent=11 // pred_check_branch
        %167 = sbr.rel (%p165) target = $region16
      $region15: #{basic_conv2d.2} parent=11 // pred_region
        %s168 = smul.u32 16, %s21
        %p169 = scmp.lt.s32.totalorder %s168, 15
        %s170 = scalar_select %p169, %s168, 15
        %s171 = smul.addr %s170, 4
        %s172 = scalar_lea.vmem %s1, %s171
        %s173 = smul.u32 16, %s21
      $region16: #{basic_conv2d.2} parent=11 // pred_fallthru
        _
      // Predicated region
      $region17: #{basic_conv2d.2} parent=11 // pred_check
        %p174 = pneg %p98
      $region18: #{basic_conv2d.2} parent=11 // pred_check_branch
        %176 = sbr.rel (%p174) target = $region20
      $region19: #{basic_conv2d.2} parent=11 // pred_region
        _
      $region20: #{basic_conv2d.2} parent=11 // pred_fallthru
        _
    $region12: #{basic_conv2d.2} parent=5 // pred_fallthru
      _
    %p177 = scmp.lt.s32.totalorder %s11, 2
    // Predicated region
    $region21: #{basic_conv2d.2} parent=5 // pred_check
      %p178 = pneg %p177
    $region22: #{basic_conv2d.2} parent=5 // pred_check_branch
      %180 = sbr.rel (%p178) target = $region24
    $region23: #{basic_conv2d.2} parent=5 // pred_region
      // Predicated region
      $region25: #{basic_conv2d.2} parent=23 // pred_check
        %p181 = pneg %p45
      $region26: #{basic_conv2d.2} parent=23 // pred_check_branch
        %183 = sbr.rel (%p181) target = $region28
      $region27: #{basic_conv2d.2} parent=23 // pred_region
        %s184 = smul.u32 32, %s18
        %p185 = scmp.lt.s32.totalorder %s184, 63
        %s186 = scalar_select %p185, %s184, 63
        %p187 = scmp.lt.s32.totalorder %s19, 0
        %s188 = scalar_select %p187, %s19, 0
        %s189 = sadd.s32 %s188, %s186
        %s190 = smul.addr %s189, 4
        %s191 = scalar_lea.vmem %s0, %s190
        %s192 = smul.u32 32, %s18
      $region28: #{basic_conv2d.2} parent=23 // pred_fallthru
        _
    $region24: #{basic_conv2d.2} parent=5 // pred_fallthru
      _
    %p193 = scmp.le.s32.totalorder 1, %s11
    %p194 = scmp.lt.s32.totalorder %s11, 3
    %p195 = pnand %p193, %p194
    %p196 = pneg %p195
    // Predicated region
    $region29: #{basic_conv2d.2} parent=5 // pred_check
      _
    $region30: #{basic_conv2d.2} parent=5 // pred_check_branch
      %198 = sbr.rel (%p195) target = $region32
    $region31: #{basic_conv2d.2} parent=5 // pred_region
      %s199 = ssub.s32 %s11, 1
      %s200 = smul.u32 32, %s20
      %p201 = scmp.lt.s32.totalorder %s200, 63
      %s202 = scalar_select %p201, %s200, 63
      %p203 = scmp.lt.s32.totalorder %s21, 0
      %s204 = scalar_select %p203, %s21, 0
      %s205 = sadd.s32 %s204, %s202
      %s206 = smul.addr %s205, 4
      %s207 = scalar_lea.vmem %s0, %s206
      %p208 = pneg %p51
      %p209 = pneg %p48
      %s210 = smul.u32 16, %s21
      %p211 = scmp.lt.s32.totalorder %s210, 15
      %s212 = scalar_select %p211, %s210, 15
      %s213 = smul.addr %s212, 4
      %s214 = scalar_lea.vmem %s1, %s213
      %p215 = pneg %p77
      %p216 = pneg %p74
      %p217 = pneg %p98
      %p218 = pneg %p95
      %p219 = pneg %p124
      %p220 = pneg %p121
      %s221 = smul.u32 32, %s20
      %p222 = scmp.lt.s32.totalorder %s221, 63
      %s223 = scalar_select %p222, %s221, 63
      %s224 = smul.addr %s223, 8
      %s225 = scalar_lea.vmem %s3, %s224
      %p226 = pneg %p150
      %p227 = pneg %p147
      %p228 = scmp.lt.s32.totalorder %s20, 1
      %s229 = scalar_select %p228, %s20, 1
      %s230 = smul.addr %s229, 8
      %s231 = scalar_lea.vmem %s4, %s230
      %s232 = smul.u32 32, %s20
      %p233 = scmp.lt.s32.totalorder %s232, 63
      %s234 = scalar_select %p233, %s232, 63
      %p235 = scmp.lt.s32.totalorder %s21, 0
      %s236 = scalar_select %p235, %s21, 0
      %s237 = sadd.s32 %s236, %s234
      %s238 = smul.addr %s237, 4
      %s239 = scalar_lea.vmem %s0, %s238
      %s240 = smul.u32 32, %s20
      %s241 = smul.u32 16, %s21
      %p242 = scmp.lt.s32.totalorder %s241, 15
      %s243 = scalar_select %p242, %s241, 15
      %s244 = smul.addr %s243, 4
      %s245 = scalar_lea.vmem %s1, %s244
      %s246 = smul.u32 16, %s21
      %s247 = smul.u32 32, %s20
      %p248 = scmp.lt.s32.totalorder %s247, 63
      %s249 = scalar_select %p248, %s247, 63
      %s250 = smul.addr %s249, 8
      %s251 = scalar_lea.vmem %s3, %s250
      %s252 = smul.u32 32, %s20
      %p253 = scmp.lt.s32.totalorder %s20, 1
      %s254 = scalar_select %p253, %s20, 1
      %s255 = smul.addr %s254, 8
      %s256 = scalar_lea.vmem %s4, %s255
      %p258 = scmp.eq.s32.totalorder %s21, 0
      // Predicated region
      $region33: #{basic_conv2d.2} parent=31 // pred_check
        %p259 = pneg %p258
      $region34: #{basic_conv2d.2} parent=31 // pred_check_branch
        %261 = sbr.rel (%p259) target = $region36
      $region35: #{basic_conv2d.2} parent=31 // pred_region
        %262 = vst [vmem:[#allocation2] sm:$0xff] 0.0
        %263 = vst [vmem:[#allocation2 + $0x8] sm:$0xff] 0.0
        %264 = vst [vmem:[#allocation2 + $0x10] sm:$0xff] 0.0
        %265 = vst [vmem:[#allocation2 + $0x18] sm:$0xff] 0.0
        %266 = vst [vmem:[#allocation2 + $0x20] sm:$0xff] 0.0
        %267 = vst [vmem:[#allocation2 + $0x28] sm:$0xff] 0.0
        %268 = vst [vmem:[#allocation2 + $0x30] sm:$0xff] 0.0
        %269 = vst [vmem:[#allocation2 + $0x38] sm:$0xff] 0.0
        %270 = vst [vmem:[#allocation2 + $0x40] sm:$0xff] 0.0
        %271 = vst [vmem:[#allocation2 + $0x48] sm:$0xff] 0.0
        %272 = vst [vmem:[#allocation2 + $0x50] sm:$0xff] 0.0
        %273 = vst [vmem:[#allocation2 + $0x58] sm:$0xff] 0.0
        %274 = vst [vmem:[#allocation2 + $0x60] sm:$0xff] 0.0
        %275 = vst [vmem:[#allocation2 + $0x68] sm:$0xff] 0.0
        %276 = vst [vmem:[#allocation2 + $0x70] sm:$0xff] 0.0
        %277 = vst [vmem:[#allocation2 + $0x78] sm:$0xff] 0.0
        %278 = vst [vmem:[#allocation2 + $0x80] sm:$0xff] 0.0
        %279 = vst [vmem:[#allocation2 + $0x88] sm:$0xff] 0.0
        %280 = vst [vmem:[#allocation2 + $0x90] sm:$0xff] 0.0
        %281 = vst [vmem:[#allocation2 + $0x98] sm:$0xff] 0.0
        %282 = vst [vmem:[#allocation2 + $0xa0] sm:$0xff] 0.0
        %283 = vst [vmem:[#allocation2 + $0xa8] sm:$0xff] 0.0
        %284 = vst [vmem:[#allocation2 + $0xb0] sm:$0xff] 0.0
        %285 = vst [vmem:[#allocation2 + $0xb8] sm:$0xff] 0.0
        %286 = vst [vmem:[#allocation2 + $0xc0] sm:$0xff] 0.0
        %287 = vst [vmem:[#allocation2 + $0xc8] sm:$0xff] 0.0
        %288 = vst [vmem:[#allocation2 + $0xd0] sm:$0xff] 0.0
        %289 = vst [vmem:[#allocation2 + $0xd8] sm:$0xff] 0.0
        %290 = vst [vmem:[#allocation2 + $0xe0] sm:$0xff] 0.0
        %291 = vst [vmem:[#allocation2 + $0xe8] sm:$0xff] 0.0
        %292 = vst [vmem:[#allocation2 + $0xf0] sm:$0xff] 0.0
        %293 = vst [vmem:[#allocation2 + $0xf8] sm:$0xff] 0.0
      $region36: #{basic_conv2d.2} parent=31 // pred_fallthru
        _
      %v294 = vld [vmem:[#allocation2] sm:$0xff]
      %v295 = vld [vmem:[#allocation2 + $0x8] sm:$0xff]
      %v296 = vld [vmem:[#allocation2 + $0x10] sm:$0xff]
      %v297 = vld [vmem:[#allocation2 + $0x18] sm:$0xff]
      %v298 = vld [vmem:[#allocation2 + $0x20] sm:$0xff]
      %v299 = vld [vmem:[#allocation2 + $0x28] sm:$0xff]
      %v300 = vld [vmem:[#allocation2 + $0x30] sm:$0xff]
      %v301 = vld [vmem:[#allocation2 + $0x38] sm:$0xff]
      %v302 = vld [vmem:[#allocation2 + $0x40] sm:$0xff]
      %v303 = vld [vmem:[#allocation2 + $0x48] sm:$0xff]
      %v304 = vld [vmem:[#allocation2 + $0x50] sm:$0xff]
      %v305 = vld [vmem:[#allocation2 + $0x58] sm:$0xff]
      %v306 = vld [vmem:[#allocation2 + $0x60] sm:$0xff]
      %v307 = vld [vmem:[#allocation2 + $0x68] sm:$0xff]
      %v308 = vld [vmem:[#allocation2 + $0x70] sm:$0xff]
      %v309 = vld [vmem:[#allocation2 + $0x78] sm:$0xff]
      %v310 = vld [vmem:[#allocation2 + $0x80] sm:$0xff]
      %v311 = vld [vmem:[#allocation2 + $0x88] sm:$0xff]
      %v312 = vld [vmem:[#allocation2 + $0x90] sm:$0xff]
      %v313 = vld [vmem:[#allocation2 + $0x98] sm:$0xff]
      %v314 = vld [vmem:[#allocation2 + $0xa0] sm:$0xff]
      %v315 = vld [vmem:[#allocation2 + $0xa8] sm:$0xff]
      %v316 = vld [vmem:[#allocation2 + $0xb0] sm:$0xff]
      %v317 = vld [vmem:[#allocation2 + $0xb8] sm:$0xff]
      %v318 = vld [vmem:[#allocation2 + $0xc0] sm:$0xff]
      %v319 = vld [vmem:[#allocation2 + $0xc8] sm:$0xff]
      %v320 = vld [vmem:[#allocation2 + $0xd0] sm:$0xff]
      %v321 = vld [vmem:[#allocation2 + $0xd8] sm:$0xff]
      %v322 = vld [vmem:[#allocation2 + $0xe0] sm:$0xff]
      %v323 = vld [vmem:[#allocation2 + $0xe8] sm:$0xff]
      %v324 = vld [vmem:[#allocation2 + $0xf0] sm:$0xff]
      %v325 = vld [vmem:[#allocation2 + $0xf8] sm:$0xff]
      %v326 = vld [vmem:[%s239] sm:$0xf]
      %v327 = vld [vmem:[%s239 + $0x4] sm:$0xf]
      %v328 = vld [vmem:[%s239 + $0x8] sm:$0xf]
      %v329 = vld [vmem:[%s239 + $0xc] sm:$0xf]
      %v330 = vld [vmem:[%s239 + $0x10] sm:$0xf]
      %v331 = vld [vmem:[%s239 + $0x14] sm:$0xf]
      %v332 = vld [vmem:[%s239 + $0x18] sm:$0xf]
      %v333 = vld [vmem:[%s239 + $0x1c] sm:$0xf]
      %v334 = vld [vmem:[%s239 + $0x20] sm:$0xf]
      %v335 = vld [vmem:[%s239 + $0x24] sm:$0xf]
      %v336 = vld [vmem:[%s239 + $0x28] sm:$0xf]
      %v337 = vld [vmem:[%s239 + $0x2c] sm:$0xf]
      %v338 = vld [vmem:[%s239 + $0x30] sm:$0xf]
      %v339 = vld [vmem:[%s239 + $0x34] sm:$0xf]
      %v340 = vld [vmem:[%s239 + $0x38] sm:$0xf]
      %v341 = vld [vmem:[%s239 + $0x3c] sm:$0xf]
      %v342 = vld [vmem:[%s239 + $0x40] sm:$0xf]
      %v343 = vld [vmem:[%s239 + $0x44] sm:$0xf]
      %v344 = vld [vmem:[%s239 + $0x48] sm:$0xf]
      %v345 = vld [vmem:[%s239 + $0x4c] sm:$0xf]
      %v346 = vld [vmem:[%s239 + $0x50] sm:$0xf]
      %v347 = vld [vmem:[%s239 + $0x54] sm:$0xf]
      %v348 = vld [vmem:[%s239 + $0x58] sm:$0xf]
      %v349 = vld [vmem:[%s239 + $0x5c] sm:$0xf]
      %v350 = vld [vmem:[%s239 + $0x60] sm:$0xf]
      %v351 = vld [vmem:[%s239 + $0x64] sm:$0xf]
      %v352 = vld [vmem:[%s239 + $0x68] sm:$0xf]
      %v353 = vld [vmem:[%s239 + $0x6c] sm:$0xf]
      %v354 = vld [vmem:[%s239 + $0x70] sm:$0xf]
      %v355 = vld [vmem:[%s239 + $0x74] sm:$0xf]
      %v356 = vld [vmem:[%s239 + $0x78] sm:$0xf]
      %v357 = vld [vmem:[%s239 + $0x7c] sm:$0xf]
      %v358 = vld [vmem:[%s245] sm:$0xf]
      %v359 = vld [vmem:[%s245 + $0x4] sm:$0xf]
      %v360 = vld [vmem:[%s245 + $0x8] sm:$0xf]
      %v361 = vld [vmem:[%s245 + $0xc] sm:$0xf]
      %v362 = vld [vmem:[%s245 + $0x10] sm:$0xf]
      %v363 = vld [vmem:[%s245 + $0x14] sm:$0xf]
      %v364 = vld [vmem:[%s245 + $0x18] sm:$0xf]
      %v365 = vld [vmem:[%s245 + $0x1c] sm:$0xf]
      %v366 = vld [vmem:[%s245 + $0x20] sm:$0xf]
      %v367 = vld [vmem:[%s245 + $0x24] sm:$0xf]
      %v368 = vld [vmem:[%s245 + $0x28] sm:$0xf]
      %v369 = vld [vmem:[%s245 + $0x2c] sm:$0xf]
      %v370 = vld [vmem:[%s245 + $0x30] sm:$0xf]
      %v371 = vld [vmem:[%s245 + $0x34] sm:$0xf]
      %v372 = vld [vmem:[%s245 + $0x38] sm:$0xf]
      %v373 = vld [vmem:[%s245 + $0x3c] sm:$0xf]
      %v406 = vunpack.c.l.b16 %v326
      %v407 = vunpack.c.l.b16 %v327
      %v408 = vunpack.c.l.b16 %v328
      %v409 = vunpack.c.l.b16 %v329
      %v410 = vunpack.c.l.b16 %v330
      %v411 = vunpack.c.l.b16 %v331
      %v412 = vunpack.c.l.b16 %v332
      %v413 = vunpack.c.l.b16 %v333
      %v414 = vunpack.c.l.b16 %v334
      %v415 = vunpack.c.l.b16 %v335
      %v416 = vunpack.c.l.b16 %v336
      %v417 = vunpack.c.l.b16 %v337
      %v418 = vunpack.c.l.b16 %v338
      %v419 = vunpack.c.l.b16 %v339
      %v420 = vunpack.c.l.b16 %v340
      %v421 = vunpack.c.l.b16 %v341
      %v422 = vunpack.c.l.b16 %v342
      %v423 = vunpack.c.l.b16 %v343
      %v424 = vunpack.c.l.b16 %v344
      %v425 = vunpack.c.l.b16 %v345
      %v426 = vunpack.c.l.b16 %v346
      %v427 = vunpack.c.l.b16 %v347
      %v428 = vunpack.c.l.b16 %v348
      %v429 = vunpack.c.l.b16 %v349
      %v430 = vunpack.c.l.b16 %v350
      %v431 = vunpack.c.l.b16 %v351
      %v432 = vunpack.c.l.b16 %v352
      %v433 = vunpack.c.l.b16 %v353
      %v434 = vunpack.c.l.b16 %v354
      %v435 = vunpack.c.l.b16 %v355
      %v436 = vunpack.c.l.b16 %v356
      %v437 = vunpack.c.l.b16 %v357
      %v438 = vpack.c.b16 %v407, %v406
      %v439 = vpack.c.b16 %v409, %v408
      %v440 = vpack.c.b16 %v411, %v410
      %v441 = vpack.c.b16 %v413, %v412
      %v442 = vpack.c.b16 %v415, %v414
      %v443 = vpack.c.b16 %v417, %v416
      %v444 = vpack.c.b16 %v419, %v418
      %v445 = vpack.c.b16 %v421, %v420
      %v446 = vpack.c.b16 %v423, %v422
      %v447 = vpack.c.b16 %v425, %v424
      %v448 = vpack.c.b16 %v427, %v426
      %v449 = vpack.c.b16 %v429, %v428
      %v450 = vpack.c.b16 %v431, %v430
      %v451 = vpack.c.b16 %v433, %v432
      %v452 = vpack.c.b16 %v435, %v434
      %v453 = vpack.c.b16 %v437, %v436
      %v486 = vunpack.c.l.b16 %v358
      %v487 = vunpack.c.l.b16 %v359
      %v488 = vunpack.c.l.b16 %v360
      %v489 = vunpack.c.l.b16 %v361
      %v490 = vunpack.c.l.b16 %v362
      %v491 = vunpack.c.l.b16 %v363
      %v492 = vunpack.c.l.b16 %v364
      %v493 = vunpack.c.l.b16 %v365
      %v494 = vunpack.c.l.b16 %v366
      %v495 = vunpack.c.l.b16 %v367
      %v496 = vunpack.c.l.b16 %v368
      %v497 = vunpack.c.l.b16 %v369
      %v498 = vunpack.c.l.b16 %v370
      %v499 = vunpack.c.l.b16 %v371
      %v500 = vunpack.c.l.b16 %v372
      %v501 = vunpack.c.l.b16 %v373
      %v502 = vpack.c.b16 %v487, %v486
      %v503 = vpack.c.b16 %v489, %v488
      %v504 = vpack.c.b16 %v491, %v490
      %v505 = vpack.c.b16 %v493, %v492
      %v506 = vpack.c.b16 %v495, %v494
      %v507 = vpack.c.b16 %v497, %v496
      %v508 = vpack.c.b16 %v499, %v498
      %v509 = vpack.c.b16 %v501, %v500
      %518 = vmatprep.subr.bf16.mxu0 0
      %519 = vmatpush1.bf16.msra.mxu0 %v509
      %520 = vmatprep.subr.bf16.mxu0 0
      %521 = vmatpush1.bf16.msra.mxu0 %v508
      %522 = vmatprep.subr.bf16.mxu0 0
      %523 = vmatpush1.bf16.msra.mxu0 %v507
      %524 = vmatprep.subr.bf16.mxu0 0
      %525 = vmatpush1.bf16.msra.mxu0 %v506
      %526 = vmatprep.subr.bf16.mxu0 0
      %527 = vmatpush1.bf16.msra.mxu0 %v505
      %528 = vmatprep.subr.bf16.mxu0 0
      %529 = vmatpush1.bf16.msra.mxu0 %v504
      %530 = vmatprep.subr.bf16.mxu0 0
      %531 = vmatpush1.bf16.msra.mxu0 %v503
      %532 = vmatprep.subr.bf16.mxu0 0
      %533 = vmatpush1.bf16.msra.mxu0 %v502
      %534 = vmatprep.subr.bf16.mxu0 0
      %535 = vmatpush2.bf16.msra.mxu0 0
      %536 = vmatprep.subr.bf16.mxu0 0
      %537 = vmatpush2.bf16.msra.mxu0 0
      %538 = vmatprep.subr.bf16.mxu0 0
      %539 = vmatpush2.bf16.msra.mxu0 0
      %540 = vmatprep.subr.bf16.mxu0 0
      %541 = vmatpush2.bf16.msra.mxu0 0
      %542 = vmatprep.subr.bf16.mxu0 0
      %543 = vmatpush2.bf16.msra.mxu0 0
      %544 = vmatprep.subr.bf16.mxu0 0
      %545 = vmatpush2.bf16.msra.mxu0 0
      %546 = vmatprep.subr.bf16.mxu0 0
      %547 = vmatpush2.bf16.msra.mxu0 0
      %548 = vmatprep.subr.bf16.mxu0 0
      %549 = vmatpush2.bf16.msra.mxu0 0
      %550 = vmatprep.mubr.bf16.mxu0 0
      %551 = vmatmul.mubr.bf16.gmra.mxu0 %v438
      %v552 = vpop.f32.mrf.mxu0
      %v553 = vadd.f32 0.0, %v552
      %v554 = vpop.f32.mrf.mxu0
      %v555 = vpop.f32.mrf.mxu0
      %v556 = vadd.f32 0.0, %v555
      %v557 = vpop.f32.mrf.mxu0
      %558 = vmatprep.mubr.bf16.mxu0 0
      %559 = vmatmul.mubr.bf16.gmra.mxu0 %v439
      %v560 = vpop.f32.mrf.mxu0
      %v561 = vadd.f32 0.0, %v560
      %v562 = vpop.f32.mrf.mxu0
      %v563 = vpop.f32.mrf.mxu0
      %v564 = vadd.f32 0.0, %v563
      %v565 = vpop.f32.mrf.mxu0
      %566 = vmatprep.mubr.bf16.mxu0 0
      %567 = vmatmul.mubr.bf16.gmra.mxu0 %v440
      %v568 = vpop.f32.mrf.mxu0
      %v569 = vadd.f32 0.0, %v568
      %v570 = vpop.f32.mrf.mxu0
      %v571 = vpop.f32.mrf.mxu0
      %v572 = vadd.f32 0.0, %v571
      %v573 = vpop.f32.mrf.mxu0
      %574 = vmatprep.mubr.bf16.mxu0 0
      %575 = vmatmul.mubr.bf16.gmra.mxu0 %v441
      %v576 = vpop.f32.mrf.mxu0
      %v577 = vadd.f32 0.0, %v576
      %v578 = vpop.f32.mrf.mxu0
      %v579 = vpop.f32.mrf.mxu0
      %v580 = vadd.f32 0.0, %v579
      %v581 = vpop.f32.mrf.mxu0
      %582 = vmatprep.mubr.bf16.mxu0 0
      %583 = vmatmul.mubr.bf16.gmra.mxu0 %v442
      %v584 = vpop.f32.mrf.mxu0
      %v585 = vadd.f32 0.0, %v584
      %v586 = vpop.f32.mrf.mxu0
      %v587 = vpop.f32.mrf.mxu0
      %v588 = vadd.f32 0.0, %v587
      %v589 = vpop.f32.mrf.mxu0
      %590 = vmatprep.mubr.bf16.mxu0 0
      %591 = vmatmul.mubr.bf16.gmra.mxu0 %v443
      %v592 = vpop.f32.mrf.mxu0
      %v593 = vadd.f32 0.0, %v592
      %v594 = vpop.f32.mrf.mxu0
      %v595 = vpop.f32.mrf.mxu0
      %v596 = vadd.f32 0.0, %v595
      %v597 = vpop.f32.mrf.mxu0
      %598 = vmatprep.mubr.bf16.mxu0 0
      %599 = vmatmul.mubr.bf16.gmra.mxu0 %v444
      %v600 = vpop.f32.mrf.mxu0
      %v601 = vadd.f32 0.0, %v600
      %v602 = vpop.f32.mrf.mxu0
      %v603 = vpop.f32.mrf.mxu0
      %v604 = vadd.f32 0.0, %v603
      %v605 = vpop.f32.mrf.mxu0
      %606 = vmatprep.mubr.bf16.mxu0 0
      %607 = vmatmul.mubr.bf16.gmra.mxu0 %v445
      %v608 = vpop.f32.mrf.mxu0
      %v609 = vadd.f32 0.0, %v608
      %v610 = vpop.f32.mrf.mxu0
      %v611 = vpop.f32.mrf.mxu0
      %v612 = vadd.f32 0.0, %v611
      %v613 = vpop.f32.mrf.mxu0
      %614 = vmatprep.mubr.bf16.mxu0 0
      %615 = vmatmul.mubr.bf16.gmra.mxu0 %v446
      %v616 = vpop.f32.mrf.mxu0
      %v617 = vadd.f32 0.0, %v616
      %v618 = vpop.f32.mrf.mxu0
      %v619 = vpop.f32.mrf.mxu0
      %v620 = vadd.f32 0.0, %v619
      %v621 = vpop.f32.mrf.mxu0
      %622 = vmatprep.mubr.bf16.mxu0 0
      %623 = vmatmul.mubr.bf16.gmra.mxu0 %v447
      %v624 = vpop.f32.mrf.mxu0
      %v625 = vadd.f32 0.0, %v624
      %v626 = vpop.f32.mrf.mxu0
      %v627 = vpop.f32.mrf.mxu0
      %v628 = vadd.f32 0.0, %v627
      %v629 = vpop.f32.mrf.mxu0
      %630 = vmatprep.mubr.bf16.mxu0 0
      %631 = vmatmul.mubr.bf16.gmra.mxu0 %v448
      %v632 = vpop.f32.mrf.mxu0
      %v633 = vadd.f32 0.0, %v632
      %v634 = vpop.f32.mrf.mxu0
      %v635 = vpop.f32.mrf.mxu0
      %v636 = vadd.f32 0.0, %v635
      %v637 = vpop.f32.mrf.mxu0
      %638 = vmatprep.mubr.bf16.mxu0 0
      %639 = vmatmul.mubr.bf16.gmra.mxu0 %v449
      %v640 = vpop.f32.mrf.mxu0
      %v641 = vadd.f32 0.0, %v640
      %v642 = vpop.f32.mrf.mxu0
      %v643 = vpop.f32.mrf.mxu0
      %v644 = vadd.f32 0.0, %v643
      %v645 = vpop.f32.mrf.mxu0
      %646 = vmatprep.mubr.bf16.mxu0 0
      %647 = vmatmul.mubr.bf16.gmra.mxu0 %v450
      %v648 = vpop.f32.mrf.mxu0
      %v649 = vadd.f32 0.0, %v648
      %v650 = vpop.f32.mrf.mxu0
      %v651 = vpop.f32.mrf.mxu0
      %v652 = vadd.f32 0.0, %v651
      %v653 = vpop.f32.mrf.mxu0
      %654 = vmatprep.mubr.bf16.mxu0 0
      %655 = vmatmul.mubr.bf16.gmra.mxu0 %v451
      %v656 = vpop.f32.mrf.mxu0
      %v657 = vadd.f32 0.0, %v656
      %v658 = vpop.f32.mrf.mxu0
      %v659 = vpop.f32.mrf.mxu0
      %v660 = vadd.f32 0.0, %v659
      %v661 = vpop.f32.mrf.mxu0
      %662 = vmatprep.mubr.bf16.mxu0 0
      %663 = vmatmul.mubr.bf16.gmra.mxu0 %v452
      %v664 = vpop.f32.mrf.mxu0
      %v665 = vadd.f32 0.0, %v664
      %v666 = vpop.f32.mrf.mxu0
      %v667 = vpop.f32.mrf.mxu0
      %v668 = vadd.f32 0.0, %v667
      %v669 = vpop.f32.mrf.mxu0
      %670 = vmatprep.mubr.bf16.mxu0 0
      %671 = vmatmul.mubr.bf16.gmra.mxu0 %v453
      %v672 = vpop.f32.mrf.mxu0
      %v673 = vadd.f32 0.0, %v672
      %v674 = vpop.f32.mrf.mxu0
      %v675 = vpop.f32.mrf.mxu0
      %v676 = vadd.f32 0.0, %v675
      %v677 = vpop.f32.mrf.mxu0
      %678 = vdwg.mxu0
      %v679 = vadd.f32 %v294, %v553
      %v680 = vadd.f32 %v295, %v556
      %v681 = vadd.f32 %v296, %v561
      %v682 = vadd.f32 %v297, %v564
      %v683 = vadd.f32 %v298, %v569
      %v684 = vadd.f32 %v299, %v572
      %v685 = vadd.f32 %v300, %v577
      %v686 = vadd.f32 %v301, %v580
      %v687 = vadd.f32 %v302, %v585
      %v688 = vadd.f32 %v303, %v588
      %v689 = vadd.f32 %v304, %v593
      %v690 = vadd.f32 %v305, %v596
      %v691 = vadd.f32 %v306, %v601
      %v692 = vadd.f32 %v307, %v604
      %v693 = vadd.f32 %v308, %v609
      %v694 = vadd.f32 %v309, %v612
      %v695 = vadd.f32 %v310, %v617
      %v696 = vadd.f32 %v311, %v620
      %v697 = vadd.f32 %v312, %v625
      %v698 = vadd.f32 %v313, %v628
      %v699 = vadd.f32 %v314, %v633
      %v700 = vadd.f32 %v315, %v636
      %v701 = vadd.f32 %v316, %v641
      %v702 = vadd.f32 %v317, %v644
      %v703 = vadd.f32 %v318, %v649
      %v704 = vadd.f32 %v319, %v652
      %v705 = vadd.f32 %v320, %v657
      %v706 = vadd.f32 %v321, %v660
      %v707 = vadd.f32 %v322, %v665
      %v708 = vadd.f32 %v323, %v668
      %v709 = vadd.f32 %v324, %v673
      %v710 = vadd.f32 %v325, %v676
      %711 = vst [vmem:[#allocation2] sm:$0xff] %v679
      %712 = vst [vmem:[#allocation2 + $0x8] sm:$0xff] %v680
      %713 = vst [vmem:[#allocation2 + $0x10] sm:$0xff] %v681
      %714 = vst [vmem:[#allocation2 + $0x18] sm:$0xff] %v682
      %715 = vst [vmem:[#allocation2 + $0x20] sm:$0xff] %v683
      %716 = vst [vmem:[#allocation2 + $0x28] sm:$0xff] %v684
      %717 = vst [vmem:[#allocation2 + $0x30] sm:$0xff] %v685
      %718 = vst [vmem:[#allocation2 + $0x38] sm:$0xff] %v686
      %719 = vst [vmem:[#allocation2 + $0x40] sm:$0xff] %v687
      %720 = vst [vmem:[#allocation2 + $0x48] sm:$0xff] %v688
      %721 = vst [vmem:[#allocation2 + $0x50] sm:$0xff] %v689
      %722 = vst [vmem:[#allocation2 + $0x58] sm:$0xff] %v690
      %723 = vst [vmem:[#allocation2 + $0x60] sm:$0xff] %v691
      %724 = vst [vmem:[#allocation2 + $0x68] sm:$0xff] %v692
      %725 = vst [vmem:[#allocation2 + $0x70] sm:$0xff] %v693
      %726 = vst [vmem:[#allocation2 + $0x78] sm:$0xff] %v694
      %727 = vst [vmem:[#allocation2 + $0x80] sm:$0xff] %v695
      %728 = vst [vmem:[#allocation2 + $0x88] sm:$0xff] %v696
      %729 = vst [vmem:[#allocation2 + $0x90] sm:$0xff] %v697
      %730 = vst [vmem:[#allocation2 + $0x98] sm:$0xff] %v698
      %731 = vst [vmem:[#allocation2 + $0xa0] sm:$0xff] %v699
      %732 = vst [vmem:[#allocation2 + $0xa8] sm:$0xff] %v700
      %733 = vst [vmem:[#allocation2 + $0xb0] sm:$0xff] %v701
      %734 = vst [vmem:[#allocation2 + $0xb8] sm:$0xff] %v702
      %735 = vst [vmem:[#allocation2 + $0xc0] sm:$0xff] %v703
      %736 = vst [vmem:[#allocation2 + $0xc8] sm:$0xff] %v704
      %737 = vst [vmem:[#allocation2 + $0xd0] sm:$0xff] %v705
      %738 = vst [vmem:[#allocation2 + $0xd8] sm:$0xff] %v706
      %739 = vst [vmem:[#allocation2 + $0xe0] sm:$0xff] %v707
      %740 = vst [vmem:[#allocation2 + $0xe8] sm:$0xff] %v708
      %741 = vst [vmem:[#allocation2 + $0xf0] sm:$0xff] %v709
      %742 = vst [vmem:[#allocation2 + $0xf8] sm:$0xff] %v710
      // Predicated region
      $region37: #{basic_conv2d.2} parent=31 // pred_check
        %p743 = pneg %p258
      $region38: #{basic_conv2d.2} parent=31 // pred_check_branch
        %745 = sbr.rel (%p743) target = $region40
      $region39: #{basic_conv2d.2} parent=31 // pred_region
        %v746 = vld [vmem:[#allocation2] sm:$0xff]
        %v747 = vld [vmem:[#allocation2 + $0x8] sm:$0xff]
        %v748 = vld [vmem:[#allocation2 + $0x10] sm:$0xff]
        %v749 = vld [vmem:[#allocation2 + $0x18] sm:$0xff]
        %v750 = vld [vmem:[#allocation2 + $0x20] sm:$0xff]
        %v751 = vld [vmem:[#allocation2 + $0x28] sm:$0xff]
        %v752 = vld [vmem:[#allocation2 + $0x30] sm:$0xff]
        %v753 = vld [vmem:[#allocation2 + $0x38] sm:$0xff]
        %v754 = vld [vmem:[#allocation2 + $0x40] sm:$0xff]
        %v755 = vld [vmem:[#allocation2 + $0x48] sm:$0xff]
        %v756 = vld [vmem:[#allocation2 + $0x50] sm:$0xff]
        %v757 = vld [vmem:[#allocation2 + $0x58] sm:$0xff]
        %v758 = vld [vmem:[#allocation2 + $0x60] sm:$0xff]
        %v759 = vld [vmem:[#allocation2 + $0x68] sm:$0xff]
        %v760 = vld [vmem:[#allocation2 + $0x70] sm:$0xff]
        %v761 = vld [vmem:[#allocation2 + $0x78] sm:$0xff]
        %v762 = vld [vmem:[#allocation2 + $0x80] sm:$0xff]
        %v763 = vld [vmem:[#allocation2 + $0x88] sm:$0xff]
        %v764 = vld [vmem:[#allocation2 + $0x90] sm:$0xff]
        %v765 = vld [vmem:[#allocation2 + $0x98] sm:$0xff]
        %v766 = vld [vmem:[#allocation2 + $0xa0] sm:$0xff]
        %v767 = vld [vmem:[#allocation2 + $0xa8] sm:$0xff]
        %v768 = vld [vmem:[#allocation2 + $0xb0] sm:$0xff]
        %v769 = vld [vmem:[#allocation2 + $0xb8] sm:$0xff]
        %v770 = vld [vmem:[#allocation2 + $0xc0] sm:$0xff]
        %v771 = vld [vmem:[#allocation2 + $0xc8] sm:$0xff]
        %v772 = vld [vmem:[#allocation2 + $0xd0] sm:$0xff]
        %v773 = vld [vmem:[#allocation2 + $0xd8] sm:$0xff]
        %v774 = vld [vmem:[#allocation2 + $0xe0] sm:$0xff]
        %v775 = vld [vmem:[#allocation2 + $0xe8] sm:$0xff]
        %v776 = vld [vmem:[#allocation2 + $0xf0] sm:$0xff]
        %v777 = vld [vmem:[#allocation2 + $0xf8] sm:$0xff]
        %v778 = vld [vmem:[%s2] sm:$0x1]
        %v780 = vlaneseq
        %v781 = vshrl.u32 %v780, 7
        %v782 = vsub.s32 0, %v781
        %v783 = vrot.slane %v778, %v782
        %v785 = vadd.f32 %v746, %v783
        %v786 = vadd.f32 %v747, %v783
        %v787 = vadd.f32 %v748, %v783
        %v788 = vadd.f32 %v749, %v783
        %v789 = vadd.f32 %v750, %v783
        %v790 = vadd.f32 %v751, %v783
        %v791 = vadd.f32 %v752, %v783
        %v792 = vadd.f32 %v753, %v783
        %v793 = vadd.f32 %v754, %v783
        %v794 = vadd.f32 %v755, %v783
        %v795 = vadd.f32 %v756, %v783
        %v796 = vadd.f32 %v757, %v783
        %v797 = vadd.f32 %v758, %v783
        %v798 = vadd.f32 %v759, %v783
        %v799 = vadd.f32 %v760, %v783
        %v800 = vadd.f32 %v761, %v783
        %v801 = vadd.f32 %v762, %v783
        %v802 = vadd.f32 %v763, %v783
        %v803 = vadd.f32 %v764, %v783
        %v804 = vadd.f32 %v765, %v783
        %v805 = vadd.f32 %v766, %v783
        %v806 = vadd.f32 %v767, %v783
        %v807 = vadd.f32 %v768, %v783
        %v808 = vadd.f32 %v769, %v783
        %v809 = vadd.f32 %v770, %v783
        %v810 = vadd.f32 %v771, %v783
        %v811 = vadd.f32 %v772, %v783
        %v812 = vadd.f32 %v773, %v783
        %v813 = vadd.f32 %v774, %v783
        %v814 = vadd.f32 %v775, %v783
        %v815 = vadd.f32 %v776, %v783
        %v816 = vadd.f32 %v777, %v783
        %817 = vst [vmem:[%s251] sm:$0xff] %v785
        %818 = vst [vmem:[%s251 + $0x8] sm:$0xff] %v786
        %819 = vst [vmem:[%s251 + $0x10] sm:$0xff] %v787
        %820 = vst [vmem:[%s251 + $0x18] sm:$0xff] %v788
        %821 = vst [vmem:[%s251 + $0x20] sm:$0xff] %v789
        %822 = vst [vmem:[%s251 + $0x28] sm:$0xff] %v790
        %823 = vst [vmem:[%s251 + $0x30] sm:$0xff] %v791
        %824 = vst [vmem:[%s251 + $0x38] sm:$0xff] %v792
        %825 = vst [vmem:[%s251 + $0x40] sm:$0xff] %v793
        %826 = vst [vmem:[%s251 + $0x48] sm:$0xff] %v794
        %827 = vst [vmem:[%s251 + $0x50] sm:$0xff] %v795
        %828 = vst [vmem:[%s251 + $0x58] sm:$0xff] %v796
        %829 = vst [vmem:[%s251 + $0x60] sm:$0xff] %v797
        %830 = vst [vmem:[%s251 + $0x68] sm:$0xff] %v798
        %831 = vst [vmem:[%s251 + $0x70] sm:$0xff] %v799
        %832 = vst [vmem:[%s251 + $0x78] sm:$0xff] %v800
        %833 = vst [vmem:[%s251 + $0x80] sm:$0xff] %v801
        %834 = vst [vmem:[%s251 + $0x88] sm:$0xff] %v802
        %835 = vst [vmem:[%s251 + $0x90] sm:$0xff] %v803
        %836 = vst [vmem:[%s251 + $0x98] sm:$0xff] %v804
        %837 = vst [vmem:[%s251 + $0xa0] sm:$0xff] %v805
        %838 = vst [vmem:[%s251 + $0xa8] sm:$0xff] %v806
        %839 = vst [vmem:[%s251 + $0xb0] sm:$0xff] %v807
        %840 = vst [vmem:[%s251 + $0xb8] sm:$0xff] %v808
        %841 = vst [vmem:[%s251 + $0xc0] sm:$0xff] %v809
        %842 = vst [vmem:[%s251 + $0xc8] sm:$0xff] %v810
        %843 = vst [vmem:[%s251 + $0xd0] sm:$0xff] %v811
        %844 = vst [vmem:[%s251 + $0xd8] sm:$0xff] %v812
        %845 = vst [vmem:[%s251 + $0xe0] sm:$0xff] %v813
        %846 = vst [vmem:[%s251 + $0xe8] sm:$0xff] %v814
        %847 = vst [vmem:[%s251 + $0xf0] sm:$0xff] %v815
        %848 = vst [vmem:[%s251 + $0xf8] sm:$0xff] %v816
        %s849 = smul.u32 %s20, 256
        %v850 = vlaneseq
        %v851 = vshrl.u32 %v850, 7
        %v852 = vadd.s32 %v851, 8
        %v853 = vadd.s32 %v851, 16
        %v854 = vadd.s32 %v851, 24
        %v855 = vadd.s32 %v851, 32
        %v856 = vadd.s32 %v851, 40
        %v857 = vadd.s32 %v851, 48
        %v858 = vadd.s32 %v851, 56
        %v859 = vadd.s32 %v851, 64
        %v860 = vadd.s32 %v851, 72
        %v861 = vadd.s32 %v851, 80
        %v862 = vadd.s32 %v851, 88
        %v863 = vadd.s32 %v851, 96
        %v864 = vadd.s32 %v851, 104
        %v865 = vadd.s32 %v851, 112
        %v866 = vadd.s32 %v851, 120
        %v867 = vadd.s32 %v851, 128
        %v868 = vadd.s32 %v851, 136
        %v869 = vadd.s32 %v851, 144
        %v870 = vadd.s32 %v851, 152
        %v871 = vadd.s32 %v851, 160
        %v872 = vadd.s32 %v851, 168
        %v873 = vadd.s32 %v851, 176
        %v874 = vadd.s32 %v851, 184
        %v875 = vadd.s32 %v851, 192
        %v876 = vadd.s32 %v851, 200
        %v877 = vadd.s32 %v851, 208
        %v878 = vadd.s32 %v851, 216
        %v879 = vadd.s32 %v851, 224
        %v880 = vadd.s32 %v851, 232
        %v881 = vadd.s32 %v851, 240
        %v882 = vadd.s32 %v851, 248
        %v883 = vstv %s849
        %v884 = vadd.s32 %v883, %v851
        %v885 = vadd.s32 %v883, %v852
        %v886 = vadd.s32 %v883, %v853
        %v887 = vadd.s32 %v883, %v854
        %v888 = vadd.s32 %v883, %v855
        %v889 = vadd.s32 %v883, %v856
        %v890 = vadd.s32 %v883, %v857
        %v891 = vadd.s32 %v883, %v858
        %v892 = vadd.s32 %v883, %v859
        %v893 = vadd.s32 %v883, %v860
        %v894 = vadd.s32 %v883, %v861
        %v895 = vadd.s32 %v883, %v862
        %v896 = vadd.s32 %v883, %v863
        %v897 = vadd.s32 %v883, %v864
        %v898 = vadd.s32 %v883, %v865
        %v899 = vadd.s32 %v883, %v866
        %v900 = vadd.s32 %v883, %v867
        %v901 = vadd.s32 %v883, %v868
        %v902 = vadd.s32 %v883, %v869
        %v903 = vadd.s32 %v883, %v870
        %v904 = vadd.s32 %v883, %v871
        %v905 = vadd.s32 %v883, %v872
        %v906 = vadd.s32 %v883, %v873
        %v907 = vadd.s32 %v883, %v874
        %v908 = vadd.s32 %v883, %v875
        %v909 = vadd.s32 %v883, %v876
        %v910 = vadd.s32 %v883, %v877
        %v911 = vadd.s32 %v883, %v878
        %v912 = vadd.s32 %v883, %v879
        %v913 = vadd.s32 %v883, %v880
        %v914 = vadd.s32 %v883, %v881
        %v915 = vadd.s32 %v883, %v882
        %vm916 = vcmp.lt.s32.totalorder %v884, 512
        %vm917 = vcmp.lt.s32.totalorder %v885, 512
        %vm918 = vcmp.lt.s32.totalorder %v886, 512
        %vm919 = vcmp.lt.s32.totalorder %v887, 512
        %vm920 = vcmp.lt.s32.totalorder %v888, 512
        %vm921 = vcmp.lt.s32.totalorder %v889, 512
        %vm922 = vcmp.lt.s32.totalorder %v890, 512
        %vm923 = vcmp.lt.s32.totalorder %v891, 512
        %vm924 = vcmp.lt.s32.totalorder %v892, 512
        %vm925 = vcmp.lt.s32.totalorder %v893, 512
        %vm926 = vcmp.lt.s32.totalorder %v894, 512
        %vm927 = vcmp.lt.s32.totalorder %v895, 512
        %vm928 = vcmp.lt.s32.totalorder %v896, 512
        %vm929 = vcmp.lt.s32.totalorder %v897, 512
        %vm930 = vcmp.lt.s32.totalorder %v898, 512
        %vm931 = vcmp.lt.s32.totalorder %v899, 512
        %vm932 = vcmp.lt.s32.totalorder %v900, 512
        %vm933 = vcmp.lt.s32.totalorder %v901, 512
        %vm934 = vcmp.lt.s32.totalorder %v902, 512
        %vm935 = vcmp.lt.s32.totalorder %v903, 512
        %vm936 = vcmp.lt.s32.totalorder %v904, 512
        %vm937 = vcmp.lt.s32.totalorder %v905, 512
        %vm938 = vcmp.lt.s32.totalorder %v906, 512
        %vm939 = vcmp.lt.s32.totalorder %v907, 512
        %vm940 = vcmp.lt.s32.totalorder %v908, 512
        %vm941 = vcmp.lt.s32.totalorder %v909, 512
        %vm942 = vcmp.lt.s32.totalorder %v910, 512
        %vm943 = vcmp.lt.s32.totalorder %v911, 512
        %vm944 = vcmp.lt.s32.totalorder %v912, 512
        %vm945 = vcmp.lt.s32.totalorder %v913, 512
        %vm946 = vcmp.lt.s32.totalorder %v914, 512
        %vm947 = vcmp.lt.s32.totalorder %v915, 512
        %v948 = vsel %vm916, %v785, 0.0
        %v949 = vsel %vm917, %v786, 0.0
        %v950 = vsel %vm918, %v787, 0.0
        %v951 = vsel %vm919, %v788, 0.0
        %v952 = vsel %vm920, %v789, 0.0
        %v953 = vsel %vm921, %v790, 0.0
        %v954 = vsel %vm922, %v791, 0.0
        %v955 = vsel %vm923, %v792, 0.0
        %v956 = vsel %vm924, %v793, 0.0
        %v957 = vsel %vm925, %v794, 0.0
        %v958 = vsel %vm926, %v795, 0.0
        %v959 = vsel %vm927, %v796, 0.0
        %v960 = vsel %vm928, %v797, 0.0
        %v961 = vsel %vm929, %v798, 0.0
        %v962 = vsel %vm930, %v799, 0.0
        %v963 = vsel %vm931, %v800, 0.0
        %v964 = vsel %vm932, %v801, 0.0
        %v965 = vsel %vm933, %v802, 0.0
        %v966 = vsel %vm934, %v803, 0.0
        %v967 = vsel %vm935, %v804, 0.0
        %v968 = vsel %vm936, %v805, 0.0
        %v969 = vsel %vm937, %v806, 0.0
        %v970 = vsel %vm938, %v807, 0.0
        %v971 = vsel %vm939, %v808, 0.0
        %v972 = vsel %vm940, %v809, 0.0
        %v973 = vsel %vm941, %v810, 0.0
        %v974 = vsel %vm942, %v811, 0.0
        %v975 = vsel %vm943, %v812, 0.0
        %v976 = vsel %vm944, %v813, 0.0
        %v977 = vsel %vm945, %v814, 0.0
        %v978 = vsel %vm946, %v815, 0.0
        %v979 = vsel %vm947, %v816, 0.0
        %v980 = vadd.f32 %v948, %v949
        %v981 = vadd.f32 %v980, %v950
        %v982 = vadd.f32 %v981, %v951
        %v983 = vadd.f32 %v982, %v952
        %v984 = vadd.f32 %v983, %v953
        %v985 = vadd.f32 %v984, %v954
        %v986 = vadd.f32 %v985, %v955
        %v987 = vadd.f32 %v986, %v956
        %v988 = vadd.f32 %v987, %v957
        %v989 = vadd.f32 %v988, %v958
        %v990 = vadd.f32 %v989, %v959
        %v991 = vadd.f32 %v990, %v960
        %v992 = vadd.f32 %v991, %v961
        %v993 = vadd.f32 %v992, %v962
        %v994 = vadd.f32 %v993, %v963
        %v995 = vadd.f32 %v994, %v964
        %v996 = vadd.f32 %v995, %v965
        %v997 = vadd.f32 %v996, %v966
        %v998 = vadd.f32 %v997, %v967
        %v999 = vadd.f32 %v998, %v968
        %v1000 = vadd.f32 %v999, %v969
        %v1001 = vadd.f32 %v1000, %v970
        %v1002 = vadd.f32 %v1001, %v971
        %v1003 = vadd.f32 %v1002, %v972
        %v1004 = vadd.f32 %v1003, %v973
        %v1005 = vadd.f32 %v1004, %v974
        %v1006 = vadd.f32 %v1005, %v975
        %v1007 = vadd.f32 %v1006, %v976
        %v1008 = vadd.f32 %v1007, %v977
        %v1009 = vadd.f32 %v1008, %v978
        %v1010 = vadd.f32 %v1009, %v979
        %v1011 = vrot.slane %v1010, 4
        %v1012 = vadd.f32 %v1010, %v1011
        %v1013 = vrot.slane %v1012, 2
        %v1014 = vadd.f32 %v1012, %v1013
        %v1015 = vrot.slane %v1014, 1
        %v1016 = vadd.f32 %v1014, %v1015
        %v1017 = vmul.f32 %v948, %v948
        %v1018 = vmul.f32 %v949, %v949
        %v1019 = vmul.f32 %v950, %v950
        %v1020 = vmul.f32 %v951, %v951
        %v1021 = vmul.f32 %v952, %v952
        %v1022 = vmul.f32 %v953, %v953
        %v1023 = vmul.f32 %v954, %v954
        %v1024 = vmul.f32 %v955, %v955
        %v1025 = vmul.f32 %v956, %v956
        %v1026 = vmul.f32 %v957, %v957
        %v1027 = vmul.f32 %v958, %v958
        %v1028 = vmul.f32 %v959, %v959
        %v1029 = vmul.f32 %v960, %v960
        %v1030 = vmul.f32 %v961, %v961
        %v1031 = vmul.f32 %v962, %v962
        %v1032 = vmul.f32 %v963, %v963
        %v1033 = vmul.f32 %v964, %v964
        %v1034 = vmul.f32 %v965, %v965
        %v1035 = vmul.f32 %v966, %v966
        %v1036 = vmul.f32 %v967, %v967
        %v1037 = vmul.f32 %v968, %v968
        %v1038 = vmul.f32 %v969, %v969
        %v1039 = vmul.f32 %v970, %v970
        %v1040 = vmul.f32 %v971, %v971
        %v1041 = vmul.f32 %v972, %v972
        %v1042 = vmul.f32 %v973, %v973
        %v1043 = vmul.f32 %v974, %v974
        %v1044 = vmul.f32 %v975, %v975
        %v1045 = vmul.f32 %v976, %v976
        %v1046 = vmul.f32 %v977, %v977
        %v1047 = vmul.f32 %v978, %v978
        %v1048 = vmul.f32 %v979, %v979
        %v1049 = vadd.f32 %v1017, %v1018
        %v1050 = vadd.f32 %v1049, %v1019
        %v1051 = vadd.f32 %v1050, %v1020
        %v1052 = vadd.f32 %v1051, %v1021
        %v1053 = vadd.f32 %v1052, %v1022
        %v1054 = vadd.f32 %v1053, %v1023
        %v1055 = vadd.f32 %v1054, %v1024
        %v1056 = vadd.f32 %v1055, %v1025
        %v1057 = vadd.f32 %v1056, %v1026
        %v1058 = vadd.f32 %v1057, %v1027
        %v1059 = vadd.f32 %v1058, %v1028
        %v1060 = vadd.f32 %v1059, %v1029
        %v1061 = vadd.f32 %v1060, %v1030
        %v1062 = vadd.f32 %v1061, %v1031
        %v1063 = vadd.f32 %v1062, %v1032
        %v1064 = vadd.f32 %v1063, %v1033
        %v1065 = vadd.f32 %v1064, %v1034
        %v1066 = vadd.f32 %v1065, %v1035
        %v1067 = vadd.f32 %v1066, %v1036
        %v1068 = vadd.f32 %v1067, %v1037
        %v1069 = vadd.f32 %v1068, %v1038
        %v1070 = vadd.f32 %v1069, %v1039
        %v1071 = vadd.f32 %v1070, %v1040
        %v1072 = vadd.f32 %v1071, %v1041
        %v1073 = vadd.f32 %v1072, %v1042
        %v1074 = vadd.f32 %v1073, %v1043
        %v1075 = vadd.f32 %v1074, %v1044
        %v1076 = vadd.f32 %v1075, %v1045
        %v1077 = vadd.f32 %v1076, %v1046
        %v1078 = vadd.f32 %v1077, %v1047
        %v1079 = vadd.f32 %v1078, %v1048
        %v1080 = vrot.slane %v1079, 4
        %v1081 = vadd.f32 %v1079, %v1080
        %v1082 = vrot.slane %v1081, 2
        %v1083 = vadd.f32 %v1081, %v1082
        %v1084 = vrot.slane %v1083, 1
        %v1085 = vadd.f32 %v1083, %v1084
        %vm1086 = vcmp.eq.s32.totalorder %v851, 0
        %v1087 = vsel %vm1086, %v1016, 0.0
        %vm1088 = vcmp.eq.s32.totalorder %v851, 1
        %v1089 = vsel %vm1088, %v1085, 0.0
        %v1090 = vadd.f32 %v1087, %v1089
        %1091 = vst [vmem:[%s256] sm:$0xff] %v1090
      $region40: #{basic_conv2d.2} parent=31 // pred_fallthru
        _
      %s1092 = smul.u32 32, %s20
      %p1093 = scmp.lt.s32.totalorder %s1092, 63
      %s1094 = scalar_select %p1093, %s1092, 63
      %s1095 = smul.addr %s1094, 8
      %s1096 = scalar_lea.vmem %s3, %s1095
      %p1097 = scmp.lt.s32.totalorder %s20, 1
      %s1098 = scalar_select %p1097, %s20, 1
      %s1099 = smul.addr %s1098, 8
      %s1100 = scalar_lea.vmem %s4, %s1099
      // Predicated region
      $region41: #{basic_conv2d.2} parent=31 // pred_check
        %p1101 = pneg %p121
      $region42: #{basic_conv2d.2} parent=31 // pred_check_branch
        %1103 = sbr.rel (%p1101) target = $region44
      $region43: #{basic_conv2d.2} parent=31 // pred_region
        %s1104 = smul.u32 32, %s20
      $region44: #{basic_conv2d.2} parent=31 // pred_fallthru
        _
      // Predicated region
      $region45: #{basic_conv2d.2} parent=31 // pred_check
        %p1105 = pneg %p147
      $region46: #{basic_conv2d.2} parent=31 // pred_check_branch
        %1107 = sbr.rel (%p1105) target = $region48
      $region47: #{basic_conv2d.2} parent=31 // pred_region
        _
      $region48: #{basic_conv2d.2} parent=31 // pred_fallthru
        _
    $region32: #{basic_conv2d.2} parent=5 // pred_fallthru
      _
    %p1108 = scmp.le.s32.totalorder 2, %s11
    // Predicated region
    $region49: #{basic_conv2d.2} parent=5 // pred_check
      %p1109 = pneg %p1108
    $region50: #{basic_conv2d.2} parent=5 // pred_check_branch
      %1111 = sbr.rel (%p1109) target = $region52
    $region51: #{basic_conv2d.2} parent=5 // pred_region
      %s1112 = ssub.s32 %s11, 2
      // Predicated region
      $region53: #{basic_conv2d.2} parent=51 // pred_check
        %p1113 = pneg %p127
      $region54: #{basic_conv2d.2} parent=51 // pred_check_branch
        %1115 = sbr.rel (%p1113) target = $region56
      $region55: #{basic_conv2d.2} parent=51 // pred_region
        %s1116 = smul.u32 32, %s22
        %p1117 = scmp.lt.s32.totalorder %s1116, 63
        %s1118 = scalar_select %p1117, %s1116, 63
        %s1119 = smul.addr %s1118, 8
        %s1120 = scalar_lea.vmem %s3, %s1119
      $region56: #{basic_conv2d.2} parent=51 // pred_fallthru
        _
      // Predicated region
      $region57: #{basic_conv2d.2} parent=51 // pred_check
        %p1121 = pneg %p153
      $region58: #{basic_conv2d.2} parent=51 // pred_check_branch
        %1123 = sbr.rel (%p1121) target = $region60
      $region59: #{basic_conv2d.2} parent=51 // pred_region
        %p1124 = scmp.lt.s32.totalorder %s22, 1
        %s1125 = scalar_select %p1124, %s22, 1
        %s1126 = smul.addr %s1125, 8
        %s1127 = scalar_lea.vmem %s4, %s1126
      $region60: #{basic_conv2d.2} parent=51 // pred_fallthru
        _
    $region52: #{basic_conv2d.2} parent=5 // pred_fallthru
      _
  $region6: #{basic_conv2d.2} parent=0 // loop_footer
    %s15 = sadd.s32 1, %s11
  $region7: #{basic_conv2d.2} parent=0 // loop_footer_branch
    %10 = sbr.rel target = $region3
  $region8: #{basic_conv2d.2} parent=0 // loop_exit
    _

</llo_original>
